<compile_context>
chip_gen: v7x
topology: tpu7x:2x2x1
jax: 0.10.0
libtpu: 0.0.40
codegen_flags: <defaults>
</compile_context>

<pallas_src>
import math

import jax
import jax.numpy as jnp
from jax import lax
from jax.experimental import pallas as pl
from jax.experimental.pallas import tpu as pltpu

LANE = 128      # TPU lane width (last dim)
SUBLANE = 8     # TPU sublane width (second-to-last dim)


def _round_up(x, m):
    return (x + m - 1) // m * m


def _pick_b_tile(bp):
    bt = min(bp, 64)
    while bp % bt:
        bt -= SUBLANE
    return bt


def dilated_rnn_kernel(x_ref, wih0_ref, whh0_ref, b0_ref,
                       wih1_ref, whh1_ref, b1_ref,
                       out_ref,
                       h0_carry, h1_carry, u0_scr, h0_scr, u1_scr):
    """Per grid step (batch-tile bi, time-chunk ci):
       x_ref:   (Tc, Bt, D)   time-major input chunk
       weights: (D, Hp) / (Hp, Hp) pre-transposed, biases (1, Hp)
       out_ref: (Tc, Bt, Hp)  time-major output chunk (lane-dense Hp)
       h0_carry: (Bt, Hp)     layer-0 hidden, carried across time-chunks
       h1_carry: (2*Bt, Hp)   stacked [even-chain ; odd-chain] layer-1 hidden
       u0/h0/u1_scr: (Tc, Bt, Hp) chunk-local staging buffers
    """
    Tc, Bt, D = x_ref.shape
    Hp = out_ref.shape[-1]

    # Reset recurrent state at the first time-chunk of each batch tile.
    @pl.when(pl.program_id(1) == 0)
    def _():
        h0_carry[...] = jnp.zeros_like(h0_carry)
        h1_carry[...] = jnp.zeros_like(h1_carry)

    w_ih0 = wih0_ref[...]            # (D,  Hp)
    w_hh0 = whh0_ref[...]            # (Hp, Hp)
    w_ih1 = wih1_ref[...]            # (Hp, Hp)
    w_hh1 = whh1_ref[...]            # (Hp, Hp)
    b0 = b0_ref[...]                 # (1,  Hp)
    b1 = b1_ref[...]                 # (1,  Hp)

    # ---- Phase 1: batched layer-0 input projection for the whole chunk (one big matmul) ----
    x_flat = x_ref[...].reshape(Tc * Bt, D)
    u0_scr[...] = (jnp.dot(x_flat, w_ih0, preferred_element_type=jnp.float32)
                   + b0).reshape(Tc, Bt, Hp)

    # ---- Phase 2: layer-0 recurrence (dilation 1): one dependent matmul + tanh per step ----
    def l0_step(t, carry):
        h_new = jnp.tanh(
            u0_scr[t]
            + jnp.dot(h0_carry[...], w_hh0, preferred_element_type=jnp.float32))
        h0_carry[...] = h_new
        h0_scr[t] = h_new
        return carry

    lax.fori_loop(0, Tc, l0_step, 0, unroll=True)

    # ---- Phase 3: batched layer-1 input projection for the whole chunk (one big matmul) ----
    h0_flat = h0_scr[...].reshape(Tc * Bt, Hp)
    u1_scr[...] = (jnp.dot(h0_flat, w_ih1, preferred_element_type=jnp.float32)
                   + b1).reshape(Tc, Bt, Hp)

    # ---- Phase 4: layer-1 recurrence (dilation 2). The even-time and odd-time chains are
    #      independent, so process them stacked as a (2*Bt, Hp) tile: Tc/2 serial steps. ----
    def l1_step(s, carry):
        t0 = pl.multiple_of(2 * s, 2)
        u_pair = u1_scr[pl.ds(t0, 2)].reshape(2 * Bt, Hp)   # rows [0:Bt]=t0, [Bt:2Bt]=t0+1
        h_new = jnp.tanh(
            u_pair
            + jnp.dot(h1_carry[...], w_hh1, preferred_element_type=jnp.float32))
        h1_carry[...] = h_new
        out_ref[t0] = h_new[:Bt].astype(out_ref.dtype)
        out_ref[t0 + 1] = h_new[Bt:].astype(out_ref.dtype)
        return carry

    lax.fori_loop(0, Tc // 2, l1_step, 0, unroll=True)


def dilated_recurrent_encoder(x, params, *, t_chunk=8):
    """x: (B, T, D_in) float32 -> out: (B, T, H) float32."""
    B, T, D = x.shape
    H = params["w_hh0"].shape[0]

    assert t_chunk % 2 == 0, "time chunk must be even (dilation-2 pairing)"
    Hp = _round_up(H, LANE)          # lane-dense hidden width
    Bp = _round_up(B, SUBLANE)       # sublane-aligned batch
    Tp = _round_up(T, t_chunk)       # whole chunks (extra steps are causal -> discarded)
    Tc = t_chunk
    Bt = _pick_b_tile(Bp)

    # ---- one-time host-side weight prep: pad H -> Hp with zeros, pre-transpose to (K, N) ----
    def pad2(w, rows, cols):
        return jnp.pad(w, ((0, rows - w.shape[0]), (0, cols - w.shape[1])))

    w_ih0 = pad2(params["w_ih0"], Hp, D).T.astype(jnp.float32)    # (D,  Hp)
    w_hh0 = pad2(params["w_hh0"], Hp, Hp).T.astype(jnp.float32)   # (Hp, Hp)
    b0 = jnp.pad(params["b0"], ((0, 0), (0, Hp - H))).astype(jnp.float32)
    w_ih1 = pad2(params["w_ih1"], Hp, Hp).T.astype(jnp.float32)   # (Hp, Hp)
    w_hh1 = pad2(params["w_hh1"], Hp, Hp).T.astype(jnp.float32)   # (Hp, Hp)
    b1 = jnp.pad(params["b1"], ((0, 0), (0, Hp - H))).astype(jnp.float32)

    # Pad batch / time, go time-major so the serial loop indexes the leading axis.
    x_p = jnp.pad(x.astype(jnp.float32), ((0, Bp - B), (0, Tp - T), (0, 0)))
    x_tm = jnp.transpose(x_p, (1, 0, 2))                          # (Tp, Bp, D)

    grid = (Bp // Bt, Tp // Tc)      # (parallel batch tiles, sequential time chunks)

    out_tm = pl.pallas_call(
        dilated_rnn_kernel,
        out_shape=jax.ShapeDtypeStruct((Tp, Bp, Hp), jnp.float32),
        grid_spec=pltpu.PrefetchScalarGridSpec(
            num_scalar_prefetch=0,
            grid=grid,
            in_specs=[
                pl.BlockSpec((Tc, Bt, D), lambda bi, ci: (ci, bi, 0)),   # x chunk
                pl.BlockSpec((D, Hp), lambda bi, ci: (0, 0)),            # W_ih0^T
                pl.BlockSpec((Hp, Hp), lambda bi, ci: (0, 0)),           # W_hh0^T
                pl.BlockSpec((1, Hp), lambda bi, ci: (0, 0)),            # b0
                pl.BlockSpec((Hp, Hp), lambda bi, ci: (0, 0)),           # W_ih1^T
                pl.BlockSpec((Hp, Hp), lambda bi, ci: (0, 0)),           # W_hh1^T
                pl.BlockSpec((1, Hp), lambda bi, ci: (0, 0)),            # b1
            ],
            out_specs=pl.BlockSpec((Tc, Bt, Hp), lambda bi, ci: (ci, bi, 0)),
            scratch_shapes=[
                pltpu.VMEM((Bt, Hp), jnp.float32),        # layer-0 hidden carry
                pltpu.VMEM((2 * Bt, Hp), jnp.float32),    # stacked even/odd layer-1 carry
                pltpu.VMEM((Tc, Bt, Hp), jnp.float32),    # u0 = x @ W_ih0 + b0
                pltpu.VMEM((Tc, Bt, Hp), jnp.float32),    # layer-0 outputs for the chunk
                pltpu.VMEM((Tc, Bt, Hp), jnp.float32),    # u1 = h0 @ W_ih1 + b1
            ],
        ),
        compiler_params=pltpu.CompilerParams(
            dimension_semantics=("parallel", "arbitrary"),
            vmem_limit_bytes=32 * 1024 * 1024,
        ),
    )(x_tm, w_ih0, w_hh0, b0, w_ih1, w_hh1, b1)                    # (Tp, Bp, Hp)

    # Back to batch-first, drop batch / time / hidden padding.
    return jnp.transpose(out_tm, (1, 0, 2))[:B, :T, :H]


def init_params(key, input_size, hidden_size):
    """Deterministic init mimicking nn.RNN default: U(-1/sqrt(H), 1/sqrt(H))."""
    bound = 1.0 / math.sqrt(hidden_size)
    ks = jax.random.split(key, 6)
    u = lambda k, shape: jax.random.uniform(k, shape, jnp.float32, -bound, bound)
    return {
        "w_ih0": u(ks[0], (hidden_size, input_size)),
        "w_hh0": u(ks[1], (hidden_size, hidden_size)),
        "b0":    u(ks[2], (1, hidden_size)),
        "w_ih1": u(ks[3], (hidden_size, hidden_size)),
        "w_hh1": u(ks[4], (hidden_size, hidden_size)),
        "b1":    u(ks[5], (1, hidden_size)),
    }


def reference_forward(x, p):
    """Plain-JAX reference of the same dilated 2-layer RNN (sanity check)."""
    B, T, D = x.shape
    H = p["w_hh0"].shape[0]
    h0 = jnp.zeros((B, H), jnp.float32)
    h1_hist = [jnp.zeros((B, H), jnp.float32), jnp.zeros((B, H), jnp.float32)]
    outs = []
    for t in range(T):
        x_t = x[:, t, :]
        h0 = jnp.tanh(x_t @ p["w_ih0"].T + h0 @ p["w_hh0"].T + p["b0"])
        h1_prev2 = h1_hist[t % 2]
        h1 = jnp.tanh(h0 @ p["w_ih1"].T + h1_prev2 @ p["w_hh1"].T + p["b1"])
        h1_hist[t % 2] = h1
        outs.append(h1)
    return jnp.stack(outs, axis=1)


if __name__ == "__main__":
    B, T, D_IN, H = 8, 8, 16, 32          # batch, seq, input_size, output_size

    key = jax.random.PRNGKey(0)
    k_x, k_p = jax.random.split(key)
    x = jax.random.normal(k_x, (B, T, D_IN), dtype=jnp.float32)
    params = init_params(k_p, D_IN, H)

    # t_chunk=4 -> 2 sequential time-chunks in the grid (exercises the state carry).
    out = dilated_recurrent_encoder(x, params, t_chunk=4)
    out = jax.block_until_ready(out)

    ref = reference_forward(x, params)
    assert out.shape == (B, T, H), out.shape
    max_err = float(jnp.max(jnp.abs(out - ref)))
    assert jnp.allclose(out, ref, atol=2e-5, rtol=2e-5), f"mismatch vs reference: {max_err:e}"

    print("KERNEL_OK")
</pallas_src>

<mosaic_0001>
module attributes {stable_mosaic.version = 11 : i64} {
  func.func @dilated_rnn_kernel(%arg0: i32, %arg1: i32, %arg2: memref<4x8x16xf32, #tpu.memory_space<vmem>>, %arg3: memref<16x128xf32, #tpu.memory_space<vmem>>, %arg4: memref<128x128xf32, #tpu.memory_space<vmem>>, %arg5: memref<1x128xf32, #tpu.memory_space<vmem>>, %arg6: memref<128x128xf32, #tpu.memory_space<vmem>>, %arg7: memref<128x128xf32, #tpu.memory_space<vmem>>, %arg8: memref<1x128xf32, #tpu.memory_space<vmem>>, %arg9: memref<4x8x128xf32, #tpu.memory_space<vmem>>, %arg10: memref<8x128xf32, #tpu.memory_space<vmem>>, %arg11: memref<16x128xf32, #tpu.memory_space<vmem>>, %arg12: memref<4x8x128xf32, #tpu.memory_space<vmem>>, %arg13: memref<4x8x128xf32, #tpu.memory_space<vmem>>, %arg14: memref<4x8x128xf32, #tpu.memory_space<vmem>>) attributes {dimension_semantics = [#tpu.dimension_semantics<parallel>, #tpu.dimension_semantics<arbitrary>], iteration_bounds = array<i64: 1, 2>, scalar_prefetch = 0 : i64, scratch_operands = 5 : i64, tpu.core_type = #tpu.core_type<tc>, window_params = [{transform_indices = @transform_0, window_bounds = array<i64: 4, 8, 16>}, {pipeline_mode = #tpu.pipeline_mode<synchronous>, transform_indices = @transform_1, window_bounds = array<i64: 16, 128>}, {pipeline_mode = #tpu.pipeline_mode<synchronous>, transform_indices = @transform_2, window_bounds = array<i64: 128, 128>}, {pipeline_mode = #tpu.pipeline_mode<synchronous>, transform_indices = @transform_3, window_bounds = array<i64: 1, 128>}, {pipeline_mode = #tpu.pipeline_mode<synchronous>, transform_indices = @transform_4, window_bounds = array<i64: 128, 128>}, {pipeline_mode = #tpu.pipeline_mode<synchronous>, transform_indices = @transform_5, window_bounds = array<i64: 128, 128>}, {pipeline_mode = #tpu.pipeline_mode<synchronous>, transform_indices = @transform_6, window_bounds = array<i64: 1, 128>}, {transform_indices = @transform_7, window_bounds = array<i64: 4, 8, 128>}]} {
    %c0_i32 = arith.constant 0 : i32
    %0 = arith.cmpi eq, %arg1, %c0_i32 : i32
    %1 = arith.extui %0 : i1 to i32
    %c0_i32_0 = arith.constant 0 : i32
    %2 = arith.cmpi ne, %1, %c0_i32_0 : i32
    scf.if %2 {
      %cst_91 = arith.constant 0.000000e+00 : f32
      %113 = vector.broadcast %cst_91 : f32 to vector<8x128xf32>
      %c0_92 = arith.constant 0 : index
      %c0_93 = arith.constant 0 : index
      %114 = vector.load %arg10[%c0_92, %c0_93] : memref<8x128xf32, #tpu.memory_space<vmem>>, vector<8x128xf32>
      tpu.vector_store %arg10[%c0_92, %c0_93], %113 {strides = array<i32>} : memref<8x128xf32, #tpu.memory_space<vmem>>, vector<8x128xf32>,
      %cst_94 = arith.constant 0.000000e+00 : f32
      %115 = vector.broadcast %cst_94 : f32 to vector<16x128xf32>
      %c0_95 = arith.constant 0 : index
      %c0_96 = arith.constant 0 : index
      %116 = vector.load %arg11[%c0_95, %c0_96] : memref<16x128xf32, #tpu.memory_space<vmem>>, vector<16x128xf32>
      tpu.vector_store %arg11[%c0_95, %c0_96], %115 {strides = array<i32>} : memref<16x128xf32, #tpu.memory_space<vmem>>, vector<16x128xf32>,
    } else {
    }
    %c0 = arith.constant 0 : index
    %c0_1 = arith.constant 0 : index
    %3 = vector.load %arg3[%c0, %c0_1] : memref<16x128xf32, #tpu.memory_space<vmem>>, vector<16x128xf32>
    %c0_2 = arith.constant 0 : index
    %c0_3 = arith.constant 0 : index
    %4 = vector.load %arg4[%c0_2, %c0_3] : memref<128x128xf32, #tpu.memory_space<vmem>>, vector<128x128xf32>
    %c0_4 = arith.constant 0 : index
    %c0_5 = arith.constant 0 : index
    %5 = vector.load %arg6[%c0_4, %c0_5] : memref<128x128xf32, #tpu.memory_space<vmem>>, vector<128x128xf32>
    %c0_6 = arith.constant 0 : index
    %c0_7 = arith.constant 0 : index
    %6 = vector.load %arg7[%c0_6, %c0_7] : memref<128x128xf32, #tpu.memory_space<vmem>>, vector<128x128xf32>
    %c0_8 = arith.constant 0 : index
    %c0_9 = arith.constant 0 : index
    %7 = vector.load %arg5[%c0_8, %c0_9] : memref<1x128xf32, #tpu.memory_space<vmem>>, vector<1x128xf32>
    %c0_10 = arith.constant 0 : index
    %c0_11 = arith.constant 0 : index
    %8 = vector.load %arg8[%c0_10, %c0_11] : memref<1x128xf32, #tpu.memory_space<vmem>>, vector<1x128xf32>
    %c0_12 = arith.constant 0 : index
    %c0_13 = arith.constant 0 : index
    %c0_14 = arith.constant 0 : index
    %9 = vector.load %arg2[%c0_12, %c0_13, %c0_14] : memref<4x8x16xf32, #tpu.memory_space<vmem>>, vector<4x8x16xf32>
    %10 = vector.shape_cast %9 : vector<4x8x16xf32> to vector<32x16xf32>
    %cst = arith.constant dense<0.000000e+00> : vector<32x128xf32>
    %11 = tpu.matmul %10, %3, %cst {dimension_numbers = #tpu.dot_dimension_numbers<[1], [0], [0], [1], [0, 0, 1, 1], [], []>} : vector<32x16xf32>, vector<16x128xf32>, vector<32x128xf32> -> vector<32x128xf32>
    %12 = vector.broadcast %7 : vector<1x128xf32> to vector<32x128xf32>
    %13 = arith.addf %11, %12 : vector<32x128xf32>
    %14 = vector.shape_cast %13 : vector<32x128xf32> to vector<4x8x128xf32>
    %c0_15 = arith.constant 0 : index
    %c0_16 = arith.constant 0 : index
    %c0_17 = arith.constant 0 : index
    %15 = vector.load %arg12[%c0_15, %c0_16, %c0_17] : memref<4x8x128xf32, #tpu.memory_space<vmem>>, vector<4x8x128xf32>
    tpu.vector_store %arg12[%c0_15, %c0_16, %c0_17], %14 {strides = array<i32>} : memref<4x8x128xf32, #tpu.memory_space<vmem>>, vector<4x8x128xf32>,
    %c0_i32_18 = arith.constant 0 : i32
    %16 = arith.index_cast %c0_i32_18 : i32 to index
    %c0_19 = arith.constant 0 : index
    %c0_20 = arith.constant 0 : index
    %17 = vector.load %arg12[%16, %c0_19, %c0_20] : memref<4x8x128xf32, #tpu.memory_space<vmem>>, vector<1x8x128xf32>
    %18 = vector.shape_cast %17 : vector<1x8x128xf32> to vector<8x128xf32>
    %c0_21 = arith.constant 0 : index
    %c0_22 = arith.constant 0 : index
    %19 = vector.load %arg10[%c0_21, %c0_22] : memref<8x128xf32, #tpu.memory_space<vmem>>, vector<8x128xf32>
    %cst_23 = arith.constant dense<0.000000e+00> : vector<8x128xf32>
    %20 = tpu.matmul %19, %4, %cst_23 {dimension_numbers = #tpu.dot_dimension_numbers<[1], [0], [0], [1], [0, 0, 1, 1], [], []>} : vector<8x128xf32>, vector<128x128xf32>, vector<8x128xf32> -> vector<8x128xf32>
    %21 = arith.addf %18, %20 : vector<8x128xf32>
    %22 = math.tanh %21 : vector<8x128xf32>
    %c0_24 = arith.constant 0 : index
    %c0_25 = arith.constant 0 : index
    %23 = vector.load %arg10[%c0_24, %c0_25] : memref<8x128xf32, #tpu.memory_space<vmem>>, vector<8x128xf32>
    tpu.vector_store %arg10[%c0_24, %c0_25], %22 {strides = array<i32>} : memref<8x128xf32, #tpu.memory_space<vmem>>, vector<8x128xf32>,
    %24 = arith.index_cast %c0_i32_18 : i32 to index
    %c0_26 = arith.constant 0 : index
    %c0_27 = arith.constant 0 : index
    %25 = vector.load %arg13[%24, %c0_26, %c0_27] : memref<4x8x128xf32, #tpu.memory_space<vmem>>, vector<1x8x128xf32>
    %26 = vector.shape_cast %25 : vector<1x8x128xf32> to vector<8x128xf32>
    %27 = vector.shape_cast %22 : vector<8x128xf32> to vector<1x8x128xf32>
    tpu.vector_store %arg13[%24, %c0_26, %c0_27], %27 {strides = array<i32>} : memref<4x8x128xf32, #tpu.memory_space<vmem>>, vector<1x8x128xf32>,
    %c1_i32 = arith.constant 1 : i32
    %28 = arith.index_cast %c1_i32 : i32 to index
    %c0_28 = arith.constant 0 : index
    %c0_29 = arith.constant 0 : index
    %29 = vector.load %arg12[%28, %c0_28, %c0_29] : memref<4x8x128xf32, #tpu.memory_space<vmem>>, vector<1x8x128xf32>
    %30 = vector.shape_cast %29 : vector<1x8x128xf32> to vector<8x128xf32>
    %c0_30 = arith.constant 0 : index
    %c0_31 = arith.constant 0 : index
    %31 = vector.load %arg10[%c0_30, %c0_31] : memref<8x128xf32, #tpu.memory_space<vmem>>, vector<8x128xf32>
    %cst_32 = arith.constant dense<0.000000e+00> : vector<8x128xf32>
    %32 = tpu.matmul %31, %4, %cst_32 {dimension_numbers = #tpu.dot_dimension_numbers<[1], [0], [0], [1], [0, 0, 1, 1], [], []>} : vector<8x128xf32>, vector<128x128xf32>, vector<8x128xf32> -> vector<8x128xf32>
    %33 = arith.addf %30, %32 : vector<8x128xf32>
    %34 = math.tanh %33 : vector<8x128xf32>
    %c0_33 = arith.constant 0 : index
    %c0_34 = arith.constant 0 : index
    %35 = vector.load %arg10[%c0_33, %c0_34] : memref<8x128xf32, #tpu.memory_space<vmem>>, vector<8x128xf32>
    tpu.vector_store %arg10[%c0_33, %c0_34], %34 {strides = array<i32>} : memref<8x128xf32, #tpu.memory_space<vmem>>, vector<8x128xf32>,
    %36 = arith.index_cast %c1_i32 : i32 to index
    %c0_35 = arith.constant 0 : index
    %c0_36 = arith.constant 0 : index
    %37 = vector.load %arg13[%36, %c0_35, %c0_36] : memref<4x8x128xf32, #tpu.memory_space<vmem>>, vector<1x8x128xf32>
    %38 = vector.shape_cast %37 : vector<1x8x128xf32> to vector<8x128xf32>
    %39 = vector.shape_cast %34 : vector<8x128xf32> to vector<1x8x128xf32>
    tpu.vector_store %arg13[%36, %c0_35, %c0_36], %39 {strides = array<i32>} : memref<4x8x128xf32, #tpu.memory_space<vmem>>, vector<1x8x128xf32>,
    %c2_i32 = arith.constant 2 : i32
    %40 = arith.index_cast %c2_i32 : i32 to index
    %c0_37 = arith.constant 0 : index
    %c0_38 = arith.constant 0 : index
    %41 = vector.load %arg12[%40, %c0_37, %c0_38] : memref<4x8x128xf32, #tpu.memory_space<vmem>>, vector<1x8x128xf32>
    %42 = vector.shape_cast %41 : vector<1x8x128xf32> to vector<8x128xf32>
    %c0_39 = arith.constant 0 : index
    %c0_40 = arith.constant 0 : index
    %43 = vector.load %arg10[%c0_39, %c0_40] : memref<8x128xf32, #tpu.memory_space<vmem>>, vector<8x128xf32>
    %cst_41 = arith.constant dense<0.000000e+00> : vector<8x128xf32>
    %44 = tpu.matmul %43, %4, %cst_41 {dimension_numbers = #tpu.dot_dimension_numbers<[1], [0], [0], [1], [0, 0, 1, 1], [], []>} : vector<8x128xf32>, vector<128x128xf32>, vector<8x128xf32> -> vector<8x128xf32>
    %45 = arith.addf %42, %44 : vector<8x128xf32>
    %46 = math.tanh %45 : vector<8x128xf32>
    %c0_42 = arith.constant 0 : index
    %c0_43 = arith.constant 0 : index
    %47 = vector.load %arg10[%c0_42, %c0_43] : memref<8x128xf32, #tpu.memory_space<vmem>>, vector<8x128xf32>
    tpu.vector_store %arg10[%c0_42, %c0_43], %46 {strides = array<i32>} : memref<8x128xf32, #tpu.memory_space<vmem>>, vector<8x128xf32>,
    %48 = arith.index_cast %c2_i32 : i32 to index
    %c0_44 = arith.constant 0 : index
    %c0_45 = arith.constant 0 : index
    %49 = vector.load %arg13[%48, %c0_44, %c0_45] : memref<4x8x128xf32, #tpu.memory_space<vmem>>, vector<1x8x128xf32>
    %50 = vector.shape_cast %49 : vector<1x8x128xf32> to vector<8x128xf32>
    %51 = vector.shape_cast %46 : vector<8x128xf32> to vector<1x8x128xf32>
    tpu.vector_store %arg13[%48, %c0_44, %c0_45], %51 {strides = array<i32>} : memref<4x8x128xf32, #tpu.memory_space<vmem>>, vector<1x8x128xf32>,
    %c3_i32 = arith.constant 3 : i32
    %52 = arith.index_cast %c3_i32 : i32 to index
    %c0_46 = arith.constant 0 : index
    %c0_47 = arith.constant 0 : index
    %53 = vector.load %arg12[%52, %c0_46, %c0_47] : memref<4x8x128xf32, #tpu.memory_space<vmem>>, vector<1x8x128xf32>
    %54 = vector.shape_cast %53 : vector<1x8x128xf32> to vector<8x128xf32>
    %c0_48 = arith.constant 0 : index
    %c0_49 = arith.constant 0 : index
    %55 = vector.load %arg10[%c0_48, %c0_49] : memref<8x128xf32, #tpu.memory_space<vmem>>, vector<8x128xf32>
    %cst_50 = arith.constant dense<0.000000e+00> : vector<8x128xf32>
    %56 = tpu.matmul %55, %4, %cst_50 {dimension_numbers = #tpu.dot_dimension_numbers<[1], [0], [0], [1], [0, 0, 1, 1], [], []>} : vector<8x128xf32>, vector<128x128xf32>, vector<8x128xf32> -> vector<8x128xf32>
    %57 = arith.addf %54, %56 : vector<8x128xf32>
    %58 = math.tanh %57 : vector<8x128xf32>
    %c0_51 = arith.constant 0 : index
    %c0_52 = arith.constant 0 : index
    %59 = vector.load %arg10[%c0_51, %c0_52] : memref<8x128xf32, #tpu.memory_space<vmem>>, vector<8x128xf32>
    tpu.vector_store %arg10[%c0_51, %c0_52], %58 {strides = array<i32>} : memref<8x128xf32, #tpu.memory_space<vmem>>, vector<8x128xf32>,
    %60 = arith.index_cast %c3_i32 : i32 to index
    %c0_53 = arith.constant 0 : index
    %c0_54 = arith.constant 0 : index
    %61 = vector.load %arg13[%60, %c0_53, %c0_54] : memref<4x8x128xf32, #tpu.memory_space<vmem>>, vector<1x8x128xf32>
    %62 = vector.shape_cast %61 : vector<1x8x128xf32> to vector<8x128xf32>
    %63 = vector.shape_cast %58 : vector<8x128xf32> to vector<1x8x128xf32>
    tpu.vector_store %arg13[%60, %c0_53, %c0_54], %63 {strides = array<i32>} : memref<4x8x128xf32, #tpu.memory_space<vmem>>, vector<1x8x128xf32>,
    %c4_i32 = arith.constant 4 : i32
    %c0_55 = arith.constant 0 : index
    %c0_56 = arith.constant 0 : index
    %c0_57 = arith.constant 0 : index
    %64 = vector.load %arg13[%c0_55, %c0_56, %c0_57] : memref<4x8x128xf32, #tpu.memory_space<vmem>>, vector<4x8x128xf32>
    %65 = vector.shape_cast %64 : vector<4x8x128xf32> to vector<32x128xf32>
    %cst_58 = arith.constant dense<0.000000e+00> : vector<32x128xf32>
    %66 = tpu.matmul %65, %5, %cst_58 {dimension_numbers = #tpu.dot_dimension_numbers<[1], [0], [0], [1], [0, 0, 1, 1], [], []>} : vector<32x128xf32>, vector<128x128xf32>, vector<32x128xf32> -> vector<32x128xf32>
    %67 = vector.broadcast %8 : vector<1x128xf32> to vector<32x128xf32>
    %68 = arith.addf %66, %67 : vector<32x128xf32>
    %69 = vector.shape_cast %68 : vector<32x128xf32> to vector<4x8x128xf32>
    %c0_59 = arith.constant 0 : index
    %c0_60 = arith.constant 0 : index
    %c0_61 = arith.constant 0 : index
    %70 = vector.load %arg14[%c0_59, %c0_60, %c0_61] : memref<4x8x128xf32, #tpu.memory_space<vmem>>, vector<4x8x128xf32>
    tpu.vector_store %arg14[%c0_59, %c0_60, %c0_61], %69 {strides = array<i32>} : memref<4x8x128xf32, #tpu.memory_space<vmem>>, vector<4x8x128xf32>,
    %c0_i32_62 = arith.constant 0 : i32
    %c2_i32_63 = arith.constant 2 : i32
    %71 = arith.muli %c2_i32_63, %c0_i32_62 : i32
    %72 = tpu.assume_multiple %71, 2 : i32
    %73 = arith.index_cast %72 : i32 to index
    %c0_64 = arith.constant 0 : index
    %c0_65 = arith.constant 0 : index
    %74 = vector.load %arg14[%73, %c0_64, %c0_65] : memref<4x8x128xf32, #tpu.memory_space<vmem>>, vector<2x8x128xf32>
    %75 = vector.shape_cast %74 : vector<2x8x128xf32> to vector<16x128xf32>
    %c0_66 = arith.constant 0 : index
    %c0_67 = arith.constant 0 : index
    %76 = vector.load %arg11[%c0_66, %c0_67] : memref<16x128xf32, #tpu.memory_space<vmem>>, vector<16x128xf32>
    %cst_68 = arith.constant dense<0.000000e+00> : vector<16x128xf32>
    %77 = tpu.matmul %76, %6, %cst_68 {dimension_numbers = #tpu.dot_dimension_numbers<[1], [0], [0], [1], [0, 0, 1, 1], [], []>} : vector<16x128xf32>, vector<128x128xf32>, vector<16x128xf32> -> vector<16x128xf32>
    %78 = arith.addf %75, %77 : vector<16x128xf32>
    %79 = math.tanh %78 : vector<16x128xf32>
    %c0_69 = arith.constant 0 : index
    %c0_70 = arith.constant 0 : index
    %80 = vector.load %arg11[%c0_69, %c0_70] : memref<16x128xf32, #tpu.memory_space<vmem>>, vector<16x128xf32>
    tpu.vector_store %arg11[%c0_69, %c0_70], %79 {strides = array<i32>} : memref<16x128xf32, #tpu.memory_space<vmem>>, vector<16x128xf32>,
    %81 = vector.extract_strided_slice %79 {offsets = [0, 0], sizes = [8, 128], strides = [1, 1]} : vector<16x128xf32> to vector<8x128xf32>
    %82 = arith.index_cast %72 : i32 to index
    %c0_71 = arith.constant 0 : index
    %c0_72 = arith.constant 0 : index
    %83 = vector.load %arg9[%82, %c0_71, %c0_72] : memref<4x8x128xf32, #tpu.memory_space<vmem>>, vector<1x8x128xf32>
    %84 = vector.shape_cast %83 : vector<1x8x128xf32> to vector<8x128xf32>
    %85 = vector.shape_cast %81 : vector<8x128xf32> to vector<1x8x128xf32>
    tpu.vector_store %arg9[%82, %c0_71, %c0_72], %85 {strides = array<i32>} : memref<4x8x128xf32, #tpu.memory_space<vmem>>, vector<1x8x128xf32>,
    %86 = vector.extract_strided_slice %79 {offsets = [8, 0], sizes = [8, 128], strides = [1, 1]} : vector<16x128xf32> to vector<8x128xf32>
    %c1_i32_73 = arith.constant 1 : i32
    %87 = arith.addi %72, %c1_i32_73 : i32
    %88 = arith.index_cast %87 : i32 to index
    %c0_74 = arith.constant 0 : index
    %c0_75 = arith.constant 0 : index
    %89 = vector.load %arg9[%88, %c0_74, %c0_75] : memref<4x8x128xf32, #tpu.memory_space<vmem>>, vector<1x8x128xf32>
    %90 = vector.shape_cast %89 : vector<1x8x128xf32> to vector<8x128xf32>
    %91 = vector.shape_cast %86 : vector<8x128xf32> to vector<1x8x128xf32>
    tpu.vector_store %arg9[%88, %c0_74, %c0_75], %91 {strides = array<i32>} : memref<4x8x128xf32, #tpu.memory_space<vmem>>, vector<1x8x128xf32>,
    %c1_i32_76 = arith.constant 1 : i32
    %c2_i32_77 = arith.constant 2 : i32
    %92 = arith.muli %c2_i32_77, %c1_i32_76 : i32
    %93 = tpu.assume_multiple %92, 2 : i32
    %94 = arith.index_cast %93 : i32 to index
    %c0_78 = arith.constant 0 : index
    %c0_79 = arith.constant 0 : index
    %95 = vector.load %arg14[%94, %c0_78, %c0_79] : memref<4x8x128xf32, #tpu.memory_space<vmem>>, vector<2x8x128xf32>
    %96 = vector.shape_cast %95 : vector<2x8x128xf32> to vector<16x128xf32>
    %c0_80 = arith.constant 0 : index
    %c0_81 = arith.constant 0 : index
    %97 = vector.load %arg11[%c0_80, %c0_81] : memref<16x128xf32, #tpu.memory_space<vmem>>, vector<16x128xf32>
    %cst_82 = arith.constant dense<0.000000e+00> : vector<16x128xf32>
    %98 = tpu.matmul %97, %6, %cst_82 {dimension_numbers = #tpu.dot_dimension_numbers<[1], [0], [0], [1], [0, 0, 1, 1], [], []>} : vector<16x128xf32>, vector<128x128xf32>, vector<16x128xf32> -> vector<16x128xf32>
    %99 = arith.addf %96, %98 : vector<16x128xf32>
    %100 = math.tanh %99 : vector<16x128xf32>
    %c0_83 = arith.constant 0 : index
    %c0_84 = arith.constant 0 : index
    %101 = vector.load %arg11[%c0_83, %c0_84] : memref<16x128xf32, #tpu.memory_space<vmem>>, vector<16x128xf32>
    tpu.vector_store %arg11[%c0_83, %c0_84], %100 {strides = array<i32>} : memref<16x128xf32, #tpu.memory_space<vmem>>, vector<16x128xf32>,
    %102 = vector.extract_strided_slice %100 {offsets = [0, 0], sizes = [8, 128], strides = [1, 1]} : vector<16x128xf32> to vector<8x128xf32>
    %103 = arith.index_cast %93 : i32 to index
    %c0_85 = arith.constant 0 : index
    %c0_86 = arith.constant 0 : index
    %104 = vector.load %arg9[%103, %c0_85, %c0_86] : memref<4x8x128xf32, #tpu.memory_space<vmem>>, vector<1x8x128xf32>
    %105 = vector.shape_cast %104 : vector<1x8x128xf32> to vector<8x128xf32>
    %106 = vector.shape_cast %102 : vector<8x128xf32> to vector<1x8x128xf32>
    tpu.vector_store %arg9[%103, %c0_85, %c0_86], %106 {strides = array<i32>} : memref<4x8x128xf32, #tpu.memory_space<vmem>>, vector<1x8x128xf32>,
    %107 = vector.extract_strided_slice %100 {offsets = [8, 0], sizes = [8, 128], strides = [1, 1]} : vector<16x128xf32> to vector<8x128xf32>
    %c1_i32_87 = arith.constant 1 : i32
    %108 = arith.addi %93, %c1_i32_87 : i32
    %109 = arith.index_cast %108 : i32 to index
    %c0_88 = arith.constant 0 : index
    %c0_89 = arith.constant 0 : index
    %110 = vector.load %arg9[%109, %c0_88, %c0_89] : memref<4x8x128xf32, #tpu.memory_space<vmem>>, vector<1x8x128xf32>
    %111 = vector.shape_cast %110 : vector<1x8x128xf32> to vector<8x128xf32>
    %112 = vector.shape_cast %107 : vector<8x128xf32> to vector<1x8x128xf32>
    tpu.vector_store %arg9[%109, %c0_88, %c0_89], %112 {strides = array<i32>} : memref<4x8x128xf32, #tpu.memory_space<vmem>>, vector<1x8x128xf32>,
    %c2_i32_90 = arith.constant 2 : i32
    return
  }
  func.func @transform_0(%arg0: i32, %arg1: i32) -> (i32, i32, i32) {
    %c0_i32 = arith.constant 0 : i32
    %c0_i32_0 = arith.constant 0 : i32
    return %arg1, %arg0, %c0_i32 : i32, i32, i32
  }
  func.func @transform_1(%arg0: i32, %arg1: i32) -> (i32, i32) {
    %c0_i32 = arith.constant 0 : i32
    %c0_i32_0 = arith.constant 0 : i32
    %c0_i32_1 = arith.constant 0 : i32
    return %c0_i32, %c0_i32_0 : i32, i32
  }
  func.func @transform_2(%arg0: i32, %arg1: i32) -> (i32, i32) {
    %c0_i32 = arith.constant 0 : i32
    %c0_i32_0 = arith.constant 0 : i32
    %c0_i32_1 = arith.constant 0 : i32
    return %c0_i32, %c0_i32_0 : i32, i32
  }
  func.func @transform_3(%arg0: i32, %arg1: i32) -> (i32, i32) {
    %c0_i32 = arith.constant 0 : i32
    %c0_i32_0 = arith.constant 0 : i32
    %c0_i32_1 = arith.constant 0 : i32
    return %c0_i32, %c0_i32_0 : i32, i32
  }
  func.func @transform_4(%arg0: i32, %arg1: i32) -> (i32, i32) {
    %c0_i32 = arith.constant 0 : i32
    %c0_i32_0 = arith.constant 0 : i32
    %c0_i32_1 = arith.constant 0 : i32
    return %c0_i32, %c0_i32_0 : i32, i32
  }
  func.func @transform_5(%arg0: i32, %arg1: i32) -> (i32, i32) {
    %c0_i32 = arith.constant 0 : i32
    %c0_i32_0 = arith.constant 0 : i32
    %c0_i32_1 = arith.constant 0 : i32
    return %c0_i32, %c0_i32_0 : i32, i32
  }
  func.func @transform_6(%arg0: i32, %arg1: i32) -> (i32, i32) {
    %c0_i32 = arith.constant 0 : i32
    %c0_i32_0 = arith.constant 0 : i32
    %c0_i32_1 = arith.constant 0 : i32
    return %c0_i32, %c0_i32_0 : i32, i32
  }
  func.func @transform_7(%arg0: i32, %arg1: i32) -> (i32, i32, i32) {
    %c0_i32 = arith.constant 0 : i32
    %c0_i32_0 = arith.constant 0 : i32
    return %arg1, %arg0, %c0_i32 : i32, i32, i32
  }
}

</mosaic_0001>

<llo_original>
// kernel: tpu_custom_call.1
$region0: #{tpu_custom_call.1}
  #allocation0 [shape = 'u32[]', space=smem, size = 0x4, offset = 0x4, fixed_abs, tag = 'smem constant byte address 0x4 - core index']
  #allocation1 [shape = 'u32[144,128]{1,0:T(1,128)}', space=vmem, size = 0x12000, scoped, tag = 'internal scratch']
  #allocation2 [shape = 'f32[8,128]{1,0:T(8,128)}', space=vmem, size = 0x1000, scoped, tag = 'scratch operand']
  #allocation3 [shape = 'f32[16,128]{1,0:T(8,128)}', space=vmem, size = 0x2000, scoped, tag = 'scratch operand']
  #allocation4 [shape = 'f32[4,8,128]{2,1,0:T(8,128)}', space=vmem, size = 0x4000, scoped, tag = 'scratch operand']
  #allocation5 [shape = 'f32[4,8,128]{2,1,0:T(8,128)}', space=vmem, size = 0x4000, scoped, tag = 'scratch operand']
  #allocation6 [shape = 'f32[4,8,128]{2,1,0:T(8,128)}', space=vmem, size = 0x4000, scoped, tag = 'scratch operand']
  %s0 = inlined_call_operand.hbm [shape: f32[8,8,16], index: 0, kind: input, shape index: {}]
  %s1 = inlined_call_operand.hbm [shape: f32[16,128], index: 1, kind: input, shape index: {}]
  %s2 = inlined_call_operand.hbm [shape: f32[128,128], index: 2, kind: input, shape index: {}]
  %s3 = inlined_call_operand.vmem [shape: f32[1,128], index: 3, kind: input, shape index: {}]
  %s4 = inlined_call_operand.hbm [shape: f32[128,128], index: 4, kind: input, shape index: {}]
  %s5 = inlined_call_operand.hbm [shape: f32[128,128], index: 5, kind: input, shape index: {}]
  %s6 = inlined_call_operand.vmem [shape: f32[1,128], index: 6, kind: input, shape index: {}]
  %s7 = inlined_call_operand.hbm [shape: f32[8,8,128], index: 7, kind: output, shape index: {}]
  %s8 = sld [smem:[#allocation0]]
  $region85: #{tpu_custom_call.1} parent=0
    _
  %s10 = ssub.s32 1, %s8
  %s11 = scalar_select 0, %s10, %s8
  $region1: #{tpu_custom_call.1} parent=0
    #allocation7 [shape = 'u8[32768]{0}', space=vmem, size = 0x8000, scoped, tag = 'input window, operand 0']
    #allocation8 [shape = 's32[2]{0}', space=sflag, size = 0x8, scoped, tag = 'scoped memory for tpu_custom_call.1']
    #allocation9 [shape = 's32[2]{0}', space=sflag, size = 0x8, scoped, tag = 'scoped memory for tpu_custom_call.1']
    #allocation10 [shape = 'u8[8192]{0}', space=vmem, size = 0x2000, scoped, tag = 'input window, operand 1, single buffered']
    #allocation11 [shape = 's32[1]{0}', space=sflag, size = 0x4, scoped, tag = 'scoped memory for tpu_custom_call.1']
    #allocation12 [shape = 'u8[65536]{0}', space=vmem, size = 0x10000, scoped, tag = 'input window, operand 2, single buffered']
    #allocation13 [shape = 'u8[65536]{0}', space=vmem, size = 0x10000, scoped, tag = 'input window, operand 4, single buffered']
    #allocation14 [shape = 's32[1]{0}', space=sflag, size = 0x4, scoped, tag = 'scoped memory for tpu_custom_call.1']
    #allocation15 [shape = 'u8[65536]{0}', space=vmem, size = 0x10000, scoped, tag = 'input window, operand 5, single buffered']
    #allocation16 [shape = 'u8[32768]{0}', space=vmem, size = 0x8000, scoped, tag = 'output window, operand 0']
    %12 = vsyncpa [#allocation8], 0
    %s13 = scalar_lea.sflag [#allocation8], 1
    %14 = vsyncpa %s13, 0
    %15 = vsyncpa [#allocation11], 0
    %16 = vsyncpa [#allocation14], 0
    %17 = vsyncpa [#allocation9], 0
    %s18 = scalar_lea.sflag [#allocation9], 1
    %19 = vsyncpa %s18, 0
    loop: start=0, step=1, limit=4
    $region2: #{tpu_custom_call.1} parent=1 // loop_pre_header
      _
    $region3: #{tpu_custom_call.1} parent=1 // loop_header
      %s21 = sphi 0, %s25
      %p22 = scmp.ge.s32.totalorder %s21, 4
      %s28 = sphi 0, %s40
      %s29 = sphi 0, %s36
      %s30 = sphi 0, %s28
      %s31 = sphi 0, %s29
      %s32 = sphi 0, %s30
      %s33 = sphi 0, %s31
      %s45 = sphi 0, %s47
      %s48 = sphi 0, %s45
      %s49 = sphi 0, %s48
      %s65 = sphi 0, %s49
      %s69 = sphi 0, %s69
      %s71 = sphi 0, %s69
      %s72 = sphi 0, %s71
      %s86 = sphi 0, %s72
      %s90 = sphi 0, %s90
      %s92 = sphi 0, %s90
      %s93 = sphi 0, %s92
      %s107 = sphi 0, %s93
      %s111 = sphi 0, %s111
      %s113 = sphi 0, %s111
      %s114 = sphi 0, %s113
      %s128 = sphi 0, %s114
      %s132 = sphi 0, %s132
      %s134 = sphi 0, %s132
      %s135 = sphi 0, %s134
      %s149 = sphi 0, %s135
      %s153 = sphi 0, %s153
      %s155 = sphi 0, %s153
      %s156 = sphi 0, %s155
      %s170 = sphi 0, %s156
      %s174 = sphi 0, %s174
      %s176 = sphi 0, %s174
      %s177 = sphi 0, %s176
      %s191 = sphi 0, %s177
      %s199 = sphi 0, %s201
      %s202 = sphi 0, %s199
      %s203 = sphi 0, %s202
      %s219 = sphi 0, %s203
    $region4: #{tpu_custom_call.1} parent=1 // loop_header_branch
      %24 = sbr.rel (%p22) target = $region8
    $region5: #{tpu_custom_call.1} parent=1 // loop_body
      %s26 = ssub.s32 %s21, 1
      %s27 = ssub.s32 %s21, 2
      %s34 = sadd.s32 1, %s29
      %p35 = scmp.ge.s32.totalorder %s34, 2
      %s36 = scalar_select %p35, 0, %s34
      %s37 = sadd.s32 1, %s28
      %s38 = scalar_select %p35, %s37, %s28
      %p39 = scmp.ge.s32.totalorder %s38, 1
      %s40 = scalar_select %p39, 0, %s38
      %s41 = ssub.s32 %s29, %s36
      %s42 = ssub.s32 %s28, %s40
      %s43 = sor.u32 %s41, %s42
      %p44 = scmp.eq.s32.totalorder %s43, 0
      %s46 = sadd.s32 %s45, 1
      %s47 = scalar_select %p44, %s45, %s46
      %p50 = pneg %p44
      %p51 = scmp.eq.s32.totalorder %s21, 1
      %p52 = por %p50, %p51
      %p53 = scmp.ne.s32.totalorder %s45, %s48
      %p54 = scmp.eq.s32.totalorder %s21, 0
      %p55 = por %p53, %p54
      %p56 = scmp.ne.s32.totalorder %s45, %s48
      %p57 = scmp.eq.s32.totalorder %s26, 1
      %p58 = por %p56, %p57
      %p59 = scmp.ne.s32.totalorder %s48, %s49
      %p60 = scmp.eq.s32.totalorder %s26, 0
      %p61 = por %p59, %p60
      %p62 = scmp.ne.s32.totalorder %s48, %s49
      %p63 = scmp.eq.s32.totalorder %s27, 1
      %p64 = por %p62, %p63
      %p66 = scmp.ne.s32.totalorder %s49, %s65
      %p67 = scmp.eq.s32.totalorder %s27, 0
      %p68 = por %p66, %p67
      %s70 = sadd.s32 %s69, 1
      %p73 = scmp.eq.s32.totalorder %s21, 1
      %p74 = scmp.ne.s32.totalorder %s69, %s71
      %p75 = scmp.eq.s32.totalorder %s21, 0
      %p76 = por %p74, %p75
      %p77 = scmp.ne.s32.totalorder %s69, %s71
      %p78 = scmp.eq.s32.totalorder %s26, 1
      %p79 = por %p77, %p78
      %p80 = scmp.ne.s32.totalorder %s71, %s72
      %p81 = scmp.eq.s32.totalorder %s26, 0
      %p82 = por %p80, %p81
      %p83 = scmp.ne.s32.totalorder %s71, %s72
      %p84 = scmp.eq.s32.totalorder %s27, 1
      %p85 = por %p83, %p84
      %p87 = scmp.ne.s32.totalorder %s72, %s86
      %p88 = scmp.eq.s32.totalorder %s27, 0
      %p89 = por %p87, %p88
      %s91 = sadd.s32 %s90, 1
      %p94 = scmp.eq.s32.totalorder %s21, 1
      %p95 = scmp.ne.s32.totalorder %s90, %s92
      %p96 = scmp.eq.s32.totalorder %s21, 0
      %p97 = por %p95, %p96
      %p98 = scmp.ne.s32.totalorder %s90, %s92
      %p99 = scmp.eq.s32.totalorder %s26, 1
      %p100 = por %p98, %p99
      %p101 = scmp.ne.s32.totalorder %s92, %s93
      %p102 = scmp.eq.s32.totalorder %s26, 0
      %p103 = por %p101, %p102
      %p104 = scmp.ne.s32.totalorder %s92, %s93
      %p105 = scmp.eq.s32.totalorder %s27, 1
      %p106 = por %p104, %p105
      %p108 = scmp.ne.s32.totalorder %s93, %s107
      %p109 = scmp.eq.s32.totalorder %s27, 0
      %p110 = por %p108, %p109
      %s112 = sadd.s32 %s111, 1
      %p115 = scmp.eq.s32.totalorder %s21, 1
      %p116 = scmp.ne.s32.totalorder %s111, %s113
      %p117 = scmp.eq.s32.totalorder %s21, 0
      %p118 = por %p116, %p117
      %p119 = scmp.ne.s32.totalorder %s111, %s113
      %p120 = scmp.eq.s32.totalorder %s26, 1
      %p121 = por %p119, %p120
      %p122 = scmp.ne.s32.totalorder %s113, %s114
      %p123 = scmp.eq.s32.totalorder %s26, 0
      %p124 = por %p122, %p123
      %p125 = scmp.ne.s32.totalorder %s113, %s114
      %p126 = scmp.eq.s32.totalorder %s27, 1
      %p127 = por %p125, %p126
      %p129 = scmp.ne.s32.totalorder %s114, %s128
      %p130 = scmp.eq.s32.totalorder %s27, 0
      %p131 = por %p129, %p130
      %s133 = sadd.s32 %s132, 1
      %p136 = scmp.eq.s32.totalorder %s21, 1
      %p137 = scmp.ne.s32.totalorder %s132, %s134
      %p138 = scmp.eq.s32.totalorder %s21, 0
      %p139 = por %p137, %p138
      %p140 = scmp.ne.s32.totalorder %s132, %s134
      %p141 = scmp.eq.s32.totalorder %s26, 1
      %p142 = por %p140, %p141
      %p143 = scmp.ne.s32.totalorder %s134, %s135
      %p144 = scmp.eq.s32.totalorder %s26, 0
      %p145 = por %p143, %p144
      %p146 = scmp.ne.s32.totalorder %s134, %s135
      %p147 = scmp.eq.s32.totalorder %s27, 1
      %p148 = por %p146, %p147
      %p150 = scmp.ne.s32.totalorder %s135, %s149
      %p151 = scmp.eq.s32.totalorder %s27, 0
      %p152 = por %p150, %p151
      %s154 = sadd.s32 %s153, 1
      %p157 = scmp.eq.s32.totalorder %s21, 1
      %p158 = scmp.ne.s32.totalorder %s153, %s155
      %p159 = scmp.eq.s32.totalorder %s21, 0
      %p160 = por %p158, %p159
      %p161 = scmp.ne.s32.totalorder %s153, %s155
      %p162 = scmp.eq.s32.totalorder %s26, 1
      %p163 = por %p161, %p162
      %p164 = scmp.ne.s32.totalorder %s155, %s156
      %p165 = scmp.eq.s32.totalorder %s26, 0
      %p166 = por %p164, %p165
      %p167 = scmp.ne.s32.totalorder %s155, %s156
      %p168 = scmp.eq.s32.totalorder %s27, 1
      %p169 = por %p167, %p168
      %p171 = scmp.ne.s32.totalorder %s156, %s170
      %p172 = scmp.eq.s32.totalorder %s27, 0
      %p173 = por %p171, %p172
      %s175 = sadd.s32 %s174, 1
      %p178 = scmp.eq.s32.totalorder %s21, 1
      %p179 = scmp.ne.s32.totalorder %s174, %s176
      %p180 = scmp.eq.s32.totalorder %s21, 0
      %p181 = por %p179, %p180
      %p182 = scmp.ne.s32.totalorder %s174, %s176
      %p183 = scmp.eq.s32.totalorder %s26, 1
      %p184 = por %p182, %p183
      %p185 = scmp.ne.s32.totalorder %s176, %s177
      %p186 = scmp.eq.s32.totalorder %s26, 0
      %p187 = por %p185, %p186
      %p188 = scmp.ne.s32.totalorder %s176, %s177
      %p189 = scmp.eq.s32.totalorder %s27, 1
      %p190 = por %p188, %p189
      %p192 = scmp.ne.s32.totalorder %s177, %s191
      %p193 = scmp.eq.s32.totalorder %s27, 0
      %p194 = por %p192, %p193
      %s195 = ssub.s32 %s29, %s36
      %s196 = ssub.s32 %s28, %s40
      %s197 = sor.u32 %s195, %s196
      %p198 = scmp.eq.s32.totalorder %s197, 0
      %s200 = sadd.s32 %s199, 1
      %s201 = scalar_select %p198, %s199, %s200
      %p204 = pneg %p198
      %p205 = scmp.eq.s32.totalorder %s21, 1
      %p206 = por %p204, %p205
      %p207 = scmp.ne.s32.totalorder %s199, %s202
      %p208 = scmp.eq.s32.totalorder %s21, 0
      %p209 = por %p207, %p208
      %p210 = scmp.ne.s32.totalorder %s199, %s202
      %p211 = scmp.eq.s32.totalorder %s26, 1
      %p212 = por %p210, %p211
      %p213 = scmp.ne.s32.totalorder %s202, %s203
      %p214 = scmp.eq.s32.totalorder %s26, 0
      %p215 = por %p213, %p214
      %p216 = scmp.ne.s32.totalorder %s202, %s203
      %p217 = scmp.eq.s32.totalorder %s27, 1
      %p218 = por %p216, %p217
      %p220 = scmp.ne.s32.totalorder %s203, %s219
      %p221 = scmp.eq.s32.totalorder %s27, 0
      %p222 = por %p220, %p221
      %p223 = scmp.le.s32.totalorder 1, %s21
      %p224 = scmp.lt.s32.totalorder %s21, 3
      %p225 = pnand %p223, %p224
      %p226 = pneg %p225
      // Predicated region
      $region9: #{tpu_custom_call.1} parent=5 // pred_check
        _
      $region10: #{tpu_custom_call.1} parent=5 // pred_check_branch
        %228 = sbr.rel (%p225) target = $region12
      $region11: #{tpu_custom_call.1} parent=5 // pred_region
        %s229 = ssub.s32 %s21, 1
        // Predicated region
        $region13: #{tpu_custom_call.1} parent=11 // pred_check
          %p230 = pneg %p82
        $region14: #{tpu_custom_call.1} parent=11 // pred_check_branch
          %232 = sbr.rel (%p230) target = $region16
        $region15: #{tpu_custom_call.1} parent=11 // pred_region
          %s234 = ssub.s32 256, 256
          %235 = vsyncadd [#allocation11], %s234
          %s236 = sshll.u32 [#allocation10], 4
          %s237 = int_to_ptr.vmem [resolvable:$true] %s236
          %242 = dma.hbm_to_vmem [thread:$0]  %s1, 256, %s237, [#allocation11], 128, 128, 8
        $region16: #{tpu_custom_call.1} parent=11 // pred_fallthru
          _
        // Predicated region
        $region17: #{tpu_custom_call.1} parent=11 // pred_check
          %p243 = pneg %p103
        $region18: #{tpu_custom_call.1} parent=11 // pred_check_branch
          %245 = sbr.rel (%p243) target = $region20
        $region19: #{tpu_custom_call.1} parent=11 // pred_region
          %s247 = ssub.s32 2048, 2048
          %248 = vsyncadd [#allocation11], %s247
          %s249 = sshll.u32 [#allocation12], 4
          %s250 = int_to_ptr.vmem [resolvable:$true] %s249
          %255 = dma.hbm_to_vmem [thread:$0]  %s2, 2048, %s250, [#allocation11], 128, 128, 8
        $region20: #{tpu_custom_call.1} parent=11 // pred_fallthru
          _
        // Predicated region
        $region21: #{tpu_custom_call.1} parent=11 // pred_check
          %p256 = pneg %p124
        $region22: #{tpu_custom_call.1} parent=11 // pred_check_branch
          %258 = sbr.rel (%p256) target = $region24
        $region23: #{tpu_custom_call.1} parent=11 // pred_region
          _
        $region24: #{tpu_custom_call.1} parent=11 // pred_fallthru
          _
        // Predicated region
        $region25: #{tpu_custom_call.1} parent=11 // pred_check
          %p259 = pneg %p145
        $region26: #{tpu_custom_call.1} parent=11 // pred_check_branch
          %261 = sbr.rel (%p259) target = $region28
        $region27: #{tpu_custom_call.1} parent=11 // pred_region
          %s263 = ssub.s32 2048, 2048
          %264 = vsyncadd [#allocation14], %s263
          %s265 = sshll.u32 [#allocation13], 4
          %s266 = int_to_ptr.vmem [resolvable:$true] %s265
          %271 = dma.hbm_to_vmem [thread:$0]  %s4, 2048, %s266, [#allocation14], 128, 128, 8
        $region28: #{tpu_custom_call.1} parent=11 // pred_fallthru
          _
        // Predicated region
        $region29: #{tpu_custom_call.1} parent=11 // pred_check
          %p272 = pneg %p166
        $region30: #{tpu_custom_call.1} parent=11 // pred_check_branch
          %274 = sbr.rel (%p272) target = $region32
        $region31: #{tpu_custom_call.1} parent=11 // pred_region
          %s276 = ssub.s32 2048, 2048
          %277 = vsyncadd [#allocation14], %s276
          %s278 = sshll.u32 [#allocation15], 4
          %s279 = int_to_ptr.vmem [resolvable:$true] %s278
          %284 = dma.hbm_to_vmem [thread:$0]  %s5, 2048, %s279, [#allocation14], 128, 128, 8
        $region32: #{tpu_custom_call.1} parent=11 // pred_fallthru
          _
        // Predicated region
        $region33: #{tpu_custom_call.1} parent=11 // pred_check
          %p285 = pneg %p187
        $region34: #{tpu_custom_call.1} parent=11 // pred_check_branch
          %287 = sbr.rel (%p285) target = $region36
        $region35: #{tpu_custom_call.1} parent=11 // pred_region
          _
        $region36: #{tpu_custom_call.1} parent=11 // pred_fallthru
          _
      $region12: #{tpu_custom_call.1} parent=5 // pred_fallthru
        _
      %p288 = scmp.lt.s32.totalorder %s21, 2
      // Predicated region
      $region37: #{tpu_custom_call.1} parent=5 // pred_check
        %p289 = pneg %p288
      $region38: #{tpu_custom_call.1} parent=5 // pred_check_branch
        %291 = sbr.rel (%p289) target = $region40
      $region39: #{tpu_custom_call.1} parent=5 // pred_region
        // Predicated region
        $region41: #{tpu_custom_call.1} parent=39 // pred_check
          %p292 = pneg %p55
        $region42: #{tpu_custom_call.1} parent=39 // pred_check_branch
          %294 = sbr.rel (%p292) target = $region44
        $region43: #{tpu_custom_call.1} parent=39 // pred_region
          %s295 = sand.u32 %s45, 1
          %s296 = scalar_lea.sflag [#allocation8], %s295
          %s297 = sand.u32 %s45, 1
          %s298 = smul.addr %s297, 32
          %s299 = scalar_lea.vmem [#allocation7], %s298
          %s300 = smul.u32 4, %s29
          %s302 = ssub.s32 512, 512
          %303 = vsyncadd %s296, %s302
          %s304 = sadd.s32 %s28, %s300
          %s305 = smul.addr %s304, 128
          %s306 = scalar_lea.hbm %s0, %s305
          %s307 = sshll.u32 %s299, 4
          %s308 = int_to_ptr.vmem [resolvable:$true] %s307
          %313 = dma.hbm_to_vmem [thread:$0]  %s306, 512, %s308, %s296, 128, 128, 8
        $region44: #{tpu_custom_call.1} parent=39 // pred_fallthru
          _
      $region40: #{tpu_custom_call.1} parent=5 // pred_fallthru
        _
      %p314 = scmp.le.s32.totalorder 1, %s21
      %p315 = scmp.lt.s32.totalorder %s21, 3
      %p316 = pnand %p314, %p315
      %p317 = pneg %p316
      // Predicated region
      $region45: #{tpu_custom_call.1} parent=5 // pred_check
        _
      $region46: #{tpu_custom_call.1} parent=5 // pred_check_branch
        %319 = sbr.rel (%p316) target = $region48
      $region47: #{tpu_custom_call.1} parent=5 // pred_region
        %s320 = ssub.s32 %s21, 1
        %s321 = sand.u32 %s48, 1
        %s322 = scalar_lea.sflag [#allocation8], %s321
        %s323 = sand.u32 %s48, 1
        %s324 = smul.addr %s323, 32
        %s325 = scalar_lea.vmem [#allocation7], %s324
        // Predicated region
        $region49: #{tpu_custom_call.1} parent=47 // pred_check
          %p326 = pneg %p61
        $region50: #{tpu_custom_call.1} parent=47 // pred_check_branch
          %328 = sbr.rel (%p326) target = $region52
        $region51: #{tpu_custom_call.1} parent=47 // pred_region
          %329 = dma.done %s322, 512
        $region52: #{tpu_custom_call.1} parent=47 // pred_fallthru
          _
        // Predicated region
        $region53: #{tpu_custom_call.1} parent=47 // pred_check
          %p330 = pneg %p82
        $region54: #{tpu_custom_call.1} parent=47 // pred_check_branch
          %332 = sbr.rel (%p330) target = $region56
        $region55: #{tpu_custom_call.1} parent=47 // pred_region
          %333 = dma.done [#allocation11], 256
        $region56: #{tpu_custom_call.1} parent=47 // pred_fallthru
          _
        // Predicated region
        $region57: #{tpu_custom_call.1} parent=47 // pred_check
          %p334 = pneg %p103
        $region58: #{tpu_custom_call.1} parent=47 // pred_check_branch
          %336 = sbr.rel (%p334) target = $region60
        $region59: #{tpu_custom_call.1} parent=47 // pred_region
          %337 = dma.done [#allocation11], 2048
        $region60: #{tpu_custom_call.1} parent=47 // pred_fallthru
          _
        // Predicated region
        $region61: #{tpu_custom_call.1} parent=47 // pred_check
          %p338 = pneg %p145
        $region62: #{tpu_custom_call.1} parent=47 // pred_check_branch
          %340 = sbr.rel (%p338) target = $region64
        $region63: #{tpu_custom_call.1} parent=47 // pred_region
          %341 = dma.done [#allocation14], 2048
        $region64: #{tpu_custom_call.1} parent=47 // pred_fallthru
          _
        // Predicated region
        $region65: #{tpu_custom_call.1} parent=47 // pred_check
          %p342 = pneg %p166
        $region66: #{tpu_custom_call.1} parent=47 // pred_check_branch
          %344 = sbr.rel (%p342) target = $region68
        $region67: #{tpu_custom_call.1} parent=47 // pred_region
          %345 = dma.done [#allocation14], 2048
        $region68: #{tpu_custom_call.1} parent=47 // pred_fallthru
          _
        %s346 = sand.u32 %s48, 1
        %s347 = scalar_lea.sflag [#allocation8], %s346
        %s348 = sand.u32 %s48, 1
        %s349 = smul.addr %s348, 32
        %s350 = scalar_lea.vmem [#allocation7], %s349
        %p351 = pneg %p61
        %p352 = pneg %p58
        %p353 = pneg %p82
        %p354 = pneg %p79
        %p355 = pneg %p103
        %p356 = pneg %p100
        %p357 = pneg %p124
        %p358 = pneg %p121
        %p359 = pneg %p145
        %p360 = pneg %p142
        %p361 = pneg %p166
        %p362 = pneg %p163
        %p363 = pneg %p187
        %p364 = pneg %p184
        %p365 = pneg %p215
        %p366 = pneg %p212
        %s367 = sand.u32 %s202, 1
        %s368 = scalar_lea.sflag [#allocation9], %s367
        %s369 = sand.u32 %s202, 1
        %s370 = smul.addr %s369, 32
        %s371 = scalar_lea.vmem [#allocation16], %s370
        %s372 = smul.u32 4, %s31
        %s373 = smul.u32 4, %s31
        %p374 = scmp.eq.s32.totalorder %s31, 0
        // Predicated region
        $region69: #{tpu_custom_call.1} parent=47 // pred_check
          %p375 = pneg %p374
        $region70: #{tpu_custom_call.1} parent=47 // pred_check_branch
          %377 = sbr.rel (%p375) target = $region72
        $region71: #{tpu_custom_call.1} parent=47 // pred_region
          %378 = vst [vmem:[#allocation2] sm:$0xff] 0.0
          %379 = vst [vmem:[#allocation3] sm:$0xff] 0.0
          %380 = vst [vmem:[#allocation3 + $0x8] sm:$0xff] 0.0
        $region72: #{tpu_custom_call.1} parent=47 // pred_fallthru
          _
        %v381 = vld [vmem:[#allocation10] sm:$0xff]
        %v382 = vld [vmem:[#allocation10 + $0x8] sm:$0xff]
        %v383 = vld [vmem:[#allocation12] sm:$0xff]
        %v384 = vld [vmem:[#allocation12 + $0x8] sm:$0xff]
        %v385 = vld [vmem:[#allocation12 + $0x10] sm:$0xff]
        %v386 = vld [vmem:[#allocation12 + $0x18] sm:$0xff]
        %v387 = vld [vmem:[#allocation12 + $0x20] sm:$0xff]
        %v388 = vld [vmem:[#allocation12 + $0x28] sm:$0xff]
        %v389 = vld [vmem:[#allocation12 + $0x30] sm:$0xff]
        %v390 = vld [vmem:[#allocation12 + $0x38] sm:$0xff]
        %v391 = vld [vmem:[#allocation12 + $0x40] sm:$0xff]
        %v392 = vld [vmem:[#allocation12 + $0x48] sm:$0xff]
        %v393 = vld [vmem:[#allocation12 + $0x50] sm:$0xff]
        %v394 = vld [vmem:[#allocation12 + $0x58] sm:$0xff]
        %v395 = vld [vmem:[#allocation12 + $0x60] sm:$0xff]
        %v396 = vld [vmem:[#allocation12 + $0x68] sm:$0xff]
        %v397 = vld [vmem:[#allocation12 + $0x70] sm:$0xff]
        %v398 = vld [vmem:[#allocation12 + $0x78] sm:$0xff]
        %v399 = vld [vmem:[#allocation13] sm:$0xff]
        %v400 = vld [vmem:[#allocation13 + $0x8] sm:$0xff]
        %v401 = vld [vmem:[#allocation13 + $0x10] sm:$0xff]
        %v402 = vld [vmem:[#allocation13 + $0x18] sm:$0xff]
        %v403 = vld [vmem:[#allocation13 + $0x20] sm:$0xff]
        %v404 = vld [vmem:[#allocation13 + $0x28] sm:$0xff]
        %v405 = vld [vmem:[#allocation13 + $0x30] sm:$0xff]
        %v406 = vld [vmem:[#allocation13 + $0x38] sm:$0xff]
        %v407 = vld [vmem:[#allocation13 + $0x40] sm:$0xff]
        %v408 = vld [vmem:[#allocation13 + $0x48] sm:$0xff]
        %v409 = vld [vmem:[#allocation13 + $0x50] sm:$0xff]
        %v410 = vld [vmem:[#allocation13 + $0x58] sm:$0xff]
        %v411 = vld [vmem:[#allocation13 + $0x60] sm:$0xff]
        %v412 = vld [vmem:[#allocation13 + $0x68] sm:$0xff]
        %v413 = vld [vmem:[#allocation13 + $0x70] sm:$0xff]
        %v414 = vld [vmem:[#allocation13 + $0x78] sm:$0xff]
        %v415 = vld [vmem:[#allocation15] sm:$0xff]
        %v416 = vld [vmem:[#allocation15 + $0x8] sm:$0xff]
        %v417 = vld [vmem:[#allocation15 + $0x10] sm:$0xff]
        %v418 = vld [vmem:[#allocation15 + $0x18] sm:$0xff]
        %v419 = vld [vmem:[#allocation15 + $0x20] sm:$0xff]
        %v420 = vld [vmem:[#allocation15 + $0x28] sm:$0xff]
        %v421 = vld [vmem:[#allocation15 + $0x30] sm:$0xff]
        %v422 = vld [vmem:[#allocation15 + $0x38] sm:$0xff]
        %v423 = vld [vmem:[#allocation15 + $0x40] sm:$0xff]
        %v424 = vld [vmem:[#allocation15 + $0x48] sm:$0xff]
        %v425 = vld [vmem:[#allocation15 + $0x50] sm:$0xff]
        %v426 = vld [vmem:[#allocation15 + $0x58] sm:$0xff]
        %v427 = vld [vmem:[#allocation15 + $0x60] sm:$0xff]
        %v428 = vld [vmem:[#allocation15 + $0x68] sm:$0xff]
        %v429 = vld [vmem:[#allocation15 + $0x70] sm:$0xff]
        %v430 = vld [vmem:[#allocation15 + $0x78] sm:$0xff]
        %v431 = vld [vmem:[%s3] sm:$0x1]
        %v432 = vld [vmem:[%s6] sm:$0x1]
        %v433 = vld [vmem:[%s325] sm:$0xff]
        %v434 = vld [vmem:[%s325 + $0x8] sm:$0xff]
        %v435 = vld [vmem:[%s325 + $0x10] sm:$0xff]
        %v436 = vld [vmem:[%s325 + $0x18] sm:$0xff]
        %v438 = vlaneseq
        %v439 = vshrl.u32 %v438, 7
        %v440 = vsub.s32 0, %v439
        %v441 = vrot.slane %v431, %v440
        %vm443 = vcmask 130048
        %v445 = vsel %vm443, %v433, 0
        %v448 = vsel %vm443, %v434, 0
        %v451 = vsel %vm443, %v435, 0
        %v454 = vsel %vm443, %v436, 0
        %456 = vmatprep.subr.mxu0 0.0
        %457 = vmatpush1.msra.mxu0 %v381
        %458 = vmatprep.subr.mxu0 0.0
        %459 = vmatpush1.msra.mxu0 %v382
        %460 = vmatprep.subr.mxu0 0.0
        %461 = vmatpush1.msra.mxu0 0.0
        %462 = vmatprep.subr.mxu0 0.0
        %463 = vmatpush1.msra.mxu0 0.0
        %464 = vmatprep.subr.mxu0 0.0
        %465 = vmatpush1.msra.mxu0 0.0
        %466 = vmatprep.subr.mxu0 0.0
        %467 = vmatpush1.msra.mxu0 0.0
        %468 = vmatprep.subr.mxu0 0.0
        %469 = vmatpush1.msra.mxu0 0.0
        %470 = vmatprep.subr.mxu0 0.0
        %471 = vmatpush1.msra.mxu0 0.0
        %472 = vmatprep.subr.mxu0 0.0
        %473 = vmatpush1.msra.mxu0 0.0
        %474 = vmatprep.subr.mxu0 0.0
        %475 = vmatpush1.msra.mxu0 0.0
        %476 = vmatprep.subr.mxu0 0.0
        %477 = vmatpush1.msra.mxu0 0.0
        %478 = vmatprep.subr.mxu0 0.0
        %479 = vmatpush1.msra.mxu0 0.0
        %480 = vmatprep.subr.mxu0 0.0
        %481 = vmatpush1.msra.mxu0 0.0
        %482 = vmatprep.subr.mxu0 0.0
        %483 = vmatpush1.msra.mxu0 0.0
        %484 = vmatprep.subr.mxu0 0.0
        %485 = vmatpush1.msra.mxu0 0.0
        %486 = vmatprep.subr.mxu0 0.0
        %487 = vmatpush1.msra.mxu0 0.0
        %488 = vmatprep.subr.mxu0 0.0
        %489 = vmatpush1.msra.mxu0 0.0
        %490 = vmatprep.subr.mxu0 0.0
        %491 = vmatpush1.msra.mxu0 0.0
        %492 = vmatprep.subr.mxu0 0.0
        %493 = vmatpush1.msra.mxu0 0.0
        %494 = vmatprep.subr.mxu0 0.0
        %495 = vmatpush1.msra.mxu0 0.0
        %496 = vmatprep.subr.mxu0 0.0
        %497 = vmatpush1.msra.mxu0 0.0
        %498 = vmatprep.subr.mxu0 0.0
        %499 = vmatpush1.msra.mxu0 0.0
        %500 = vmatprep.subr.mxu0 0.0
        %501 = vmatpush1.msra.mxu0 0.0
        %502 = vmatprep.subr.mxu0 0.0
        %503 = vmatpush1.msra.mxu0 0.0
        %504 = vmatprep.subr.mxu0 0.0
        %505 = vmatpush1.msra.mxu0 0.0
        %506 = vmatprep.subr.mxu0 0.0
        %507 = vmatpush1.msra.mxu0 0.0
        %508 = vmatprep.subr.mxu0 0.0
        %509 = vmatpush1.msra.mxu0 0.0
        %510 = vmatprep.subr.mxu0 0.0
        %511 = vmatpush1.msra.mxu0 0.0
        %512 = vmatprep.subr.mxu0 0.0
        %513 = vmatpush1.msra.mxu0 0.0
        %514 = vmatprep.subr.mxu0 0.0
        %515 = vmatpush1.msra.mxu0 0.0
        %516 = vmatprep.subr.mxu0 0.0
        %517 = vmatpush1.msra.mxu0 0.0
        %518 = vmatprep.subr.mxu0 0.0
        %519 = vmatpush1.msra.mxu0 0.0
        %520 = vmatprep.mubr.f32.mxu0 0.0
        %521 = vmatmul.mubr.f32.gmra.mrb[0].mxu0 %v445
        %v522 = vpop.f32.mrb[0].mxu0
        %v523 = vadd.f32 %v441, %v522
        %v524 = vpop.f32.mrb[0].mxu0
        %525 = vmatprep.mubr.f32.mxu0 0.0
        %526 = vmatmul.mubr.f32.gmra.mrb[0].mxu0 %v448
        %v527 = vpop.f32.mrb[0].mxu0
        %v528 = vadd.f32 %v441, %v527
        %v529 = vpop.f32.mrb[0].mxu0
        %530 = vmatprep.mubr.f32.mxu0 0.0
        %531 = vmatmul.mubr.f32.gmra.mrb[0].mxu0 %v451
        %v532 = vpop.f32.mrb[0].mxu0
        %v533 = vadd.f32 %v441, %v532
        %v534 = vpop.f32.mrb[0].mxu0
        %535 = vmatprep.mubr.f32.mxu0 0.0
        %536 = vmatmul.mubr.f32.gmra.mrb[0].mxu0 %v454
        %v537 = vpop.f32.mrb[0].mxu0
        %v538 = vadd.f32 %v441, %v537
        %v539 = vpop.f32.mrb[0].mxu0
        %540 = vdwg.mxu0
        %541 = vst [vmem:[#allocation4] sm:$0xff] %v523
        %542 = vst [vmem:[#allocation4 + $0x8] sm:$0xff] %v528
        %543 = vst [vmem:[#allocation4 + $0x10] sm:$0xff] %v533
        %544 = vst [vmem:[#allocation4 + $0x18] sm:$0xff] %v538
        %v545 = vld [vmem:[#allocation4] sm:$0xff]
        %v546 = vld [vmem:[#allocation2] sm:$0xff]
        %547 = vmatprep.subr.mxu0 0.0
        %548 = vmatpush1.msra.mxu0 %v383
        %549 = vmatprep.subr.mxu0 0.0
        %550 = vmatpush1.msra.mxu0 %v384
        %551 = vmatprep.subr.mxu0 0.0
        %552 = vmatpush1.msra.mxu0 %v385
        %553 = vmatprep.subr.mxu0 0.0
        %554 = vmatpush1.msra.mxu0 %v386
        %555 = vmatprep.subr.mxu0 0.0
        %556 = vmatpush1.msra.mxu0 %v387
        %557 = vmatprep.subr.mxu0 0.0
        %558 = vmatpush1.msra.mxu0 %v388
        %559 = vmatprep.subr.mxu0 0.0
        %560 = vmatpush1.msra.mxu0 %v389
        %561 = vmatprep.subr.mxu0 0.0
        %562 = vmatpush1.msra.mxu0 %v390
        %563 = vmatprep.subr.mxu0 0.0
        %564 = vmatpush1.msra.mxu0 %v391
        %565 = vmatprep.subr.mxu0 0.0
        %566 = vmatpush1.msra.mxu0 %v392
        %567 = vmatprep.subr.mxu0 0.0
        %568 = vmatpush1.msra.mxu0 %v393
        %569 = vmatprep.subr.mxu0 0.0
        %570 = vmatpush1.msra.mxu0 %v394
        %571 = vmatprep.subr.mxu0 0.0
        %572 = vmatpush1.msra.mxu0 %v395
        %573 = vmatprep.subr.mxu0 0.0
        %574 = vmatpush1.msra.mxu0 %v396
        %575 = vmatprep.subr.mxu0 0.0
        %576 = vmatpush1.msra.mxu0 %v397
        %577 = vmatprep.subr.mxu0 0.0
        %578 = vmatpush1.msra.mxu0 %v398
        %579 = vmatprep.subr.mxu0 0.0
        %580 = vmatpush1.msra.mxu0 0.0
        %581 = vmatprep.subr.mxu0 0.0
        %582 = vmatpush1.msra.mxu0 0.0
        %583 = vmatprep.subr.mxu0 0.0
        %584 = vmatpush1.msra.mxu0 0.0
        %585 = vmatprep.subr.mxu0 0.0
        %586 = vmatpush1.msra.mxu0 0.0
        %587 = vmatprep.subr.mxu0 0.0
        %588 = vmatpush1.msra.mxu0 0.0
        %589 = vmatprep.subr.mxu0 0.0
        %590 = vmatpush1.msra.mxu0 0.0
        %591 = vmatprep.subr.mxu0 0.0
        %592 = vmatpush1.msra.mxu0 0.0
        %593 = vmatprep.subr.mxu0 0.0
        %594 = vmatpush1.msra.mxu0 0.0
        %595 = vmatprep.subr.mxu0 0.0
        %596 = vmatpush1.msra.mxu0 0.0
        %597 = vmatprep.subr.mxu0 0.0
        %598 = vmatpush1.msra.mxu0 0.0
        %599 = vmatprep.subr.mxu0 0.0
        %600 = vmatpush1.msra.mxu0 0.0
        %601 = vmatprep.subr.mxu0 0.0
        %602 = vmatpush1.msra.mxu0 0.0
        %603 = vmatprep.subr.mxu0 0.0
        %604 = vmatpush1.msra.mxu0 0.0
        %605 = vmatprep.subr.mxu0 0.0
        %606 = vmatpush1.msra.mxu0 0.0
        %607 = vmatprep.subr.mxu0 0.0
        %608 = vmatpush1.msra.mxu0 0.0
        %609 = vmatprep.subr.mxu0 0.0
        %610 = vmatpush1.msra.mxu0 0.0
        %611 = vmatprep.mubr.f32.mxu0 0.0
        %612 = vmatmul.mubr.f32.gmra.mrb[0].mxu0 %v546
        %v613 = vpop.f32.mrb[0].mxu0
        %v614 = vadd.f32 0.0, %v613
        %v615 = vpop.f32.mrb[0].mxu0
        %616 = vdwg.mxu0
        %v617 = vadd.f32 %v545, %v614
        %v618 = vtanh.pop %v617
        %619 = vst [vmem:[#allocation2] sm:$0xff] %v618
        %620 = vst [vmem:[#allocation5] sm:$0xff] %v618
        %s621 = scalar_lea.vmem [#allocation4], 8
        %v622 = vld [vmem:[%s621] sm:$0xff]
        %v623 = vld [vmem:[#allocation2] sm:$0xff]
        %624 = vmatprep.subr.mxu0 0.0
        %625 = vmatpush1.msra.mxu0 %v383
        %626 = vmatprep.subr.mxu0 0.0
        %627 = vmatpush1.msra.mxu0 %v384
        %628 = vmatprep.subr.mxu0 0.0
        %629 = vmatpush1.msra.mxu0 %v385
        %630 = vmatprep.subr.mxu0 0.0
        %631 = vmatpush1.msra.mxu0 %v386
        %632 = vmatprep.subr.mxu0 0.0
        %633 = vmatpush1.msra.mxu0 %v387
        %634 = vmatprep.subr.mxu0 0.0
        %635 = vmatpush1.msra.mxu0 %v388
        %636 = vmatprep.subr.mxu0 0.0
        %637 = vmatpush1.msra.mxu0 %v389
        %638 = vmatprep.subr.mxu0 0.0
        %639 = vmatpush1.msra.mxu0 %v390
        %640 = vmatprep.subr.mxu0 0.0
        %641 = vmatpush1.msra.mxu0 %v391
        %642 = vmatprep.subr.mxu0 0.0
        %643 = vmatpush1.msra.mxu0 %v392
        %644 = vmatprep.subr.mxu0 0.0
        %645 = vmatpush1.msra.mxu0 %v393
        %646 = vmatprep.subr.mxu0 0.0
        %647 = vmatpush1.msra.mxu0 %v394
        %648 = vmatprep.subr.mxu0 0.0
        %649 = vmatpush1.msra.mxu0 %v395
        %650 = vmatprep.subr.mxu0 0.0
        %651 = vmatpush1.msra.mxu0 %v396
        %652 = vmatprep.subr.mxu0 0.0
        %653 = vmatpush1.msra.mxu0 %v397
        %654 = vmatprep.subr.mxu0 0.0
        %655 = vmatpush1.msra.mxu0 %v398
        %656 = vmatprep.subr.mxu0 0.0
        %657 = vmatpush1.msra.mxu0 0.0
        %658 = vmatprep.subr.mxu0 0.0
        %659 = vmatpush1.msra.mxu0 0.0
        %660 = vmatprep.subr.mxu0 0.0
        %661 = vmatpush1.msra.mxu0 0.0
        %662 = vmatprep.subr.mxu0 0.0
        %663 = vmatpush1.msra.mxu0 0.0
        %664 = vmatprep.subr.mxu0 0.0
        %665 = vmatpush1.msra.mxu0 0.0
        %666 = vmatprep.subr.mxu0 0.0
        %667 = vmatpush1.msra.mxu0 0.0
        %668 = vmatprep.subr.mxu0 0.0
        %669 = vmatpush1.msra.mxu0 0.0
        %670 = vmatprep.subr.mxu0 0.0
        %671 = vmatpush1.msra.mxu0 0.0
        %672 = vmatprep.subr.mxu0 0.0
        %673 = vmatpush1.msra.mxu0 0.0
        %674 = vmatprep.subr.mxu0 0.0
        %675 = vmatpush1.msra.mxu0 0.0
        %676 = vmatprep.subr.mxu0 0.0
        %677 = vmatpush1.msra.mxu0 0.0
        %678 = vmatprep.subr.mxu0 0.0
        %679 = vmatpush1.msra.mxu0 0.0
        %680 = vmatprep.subr.mxu0 0.0
        %681 = vmatpush1.msra.mxu0 0.0
        %682 = vmatprep.subr.mxu0 0.0
        %683 = vmatpush1.msra.mxu0 0.0
        %684 = vmatprep.subr.mxu0 0.0
        %685 = vmatpush1.msra.mxu0 0.0
        %686 = vmatprep.subr.mxu0 0.0
        %687 = vmatpush1.msra.mxu0 0.0
        %688 = vmatprep.mubr.f32.mxu0 0.0
        %689 = vmatmul.mubr.f32.gmra.mrb[0].mxu0 %v623
        %v690 = vpop.f32.mrb[0].mxu0
        %v691 = vadd.f32 0.0, %v690
        %v692 = vpop.f32.mrb[0].mxu0
        %693 = vdwg.mxu0
        %v694 = vadd.f32 %v622, %v691
        %v695 = vtanh.pop %v694
        %696 = vst [vmem:[#allocation2] sm:$0xff] %v695
        %s697 = scalar_lea.vmem [#allocation5], 8
        %698 = vst [vmem:[%s697] sm:$0xff] %v695
        %s699 = scalar_lea.vmem [#allocation4], 16
        %v700 = vld [vmem:[%s699] sm:$0xff]
        %v701 = vld [vmem:[#allocation2] sm:$0xff]
        %702 = vmatprep.subr.mxu0 0.0
        %703 = vmatpush1.msra.mxu0 %v383
        %704 = vmatprep.subr.mxu0 0.0
        %705 = vmatpush1.msra.mxu0 %v384
        %706 = vmatprep.subr.mxu0 0.0
        %707 = vmatpush1.msra.mxu0 %v385
        %708 = vmatprep.subr.mxu0 0.0
        %709 = vmatpush1.msra.mxu0 %v386
        %710 = vmatprep.subr.mxu0 0.0
        %711 = vmatpush1.msra.mxu0 %v387
        %712 = vmatprep.subr.mxu0 0.0
        %713 = vmatpush1.msra.mxu0 %v388
        %714 = vmatprep.subr.mxu0 0.0
        %715 = vmatpush1.msra.mxu0 %v389
        %716 = vmatprep.subr.mxu0 0.0
        %717 = vmatpush1.msra.mxu0 %v390
        %718 = vmatprep.subr.mxu0 0.0
        %719 = vmatpush1.msra.mxu0 %v391
        %720 = vmatprep.subr.mxu0 0.0
        %721 = vmatpush1.msra.mxu0 %v392
        %722 = vmatprep.subr.mxu0 0.0
        %723 = vmatpush1.msra.mxu0 %v393
        %724 = vmatprep.subr.mxu0 0.0
        %725 = vmatpush1.msra.mxu0 %v394
        %726 = vmatprep.subr.mxu0 0.0
        %727 = vmatpush1.msra.mxu0 %v395
        %728 = vmatprep.subr.mxu0 0.0
        %729 = vmatpush1.msra.mxu0 %v396
        %730 = vmatprep.subr.mxu0 0.0
        %731 = vmatpush1.msra.mxu0 %v397
        %732 = vmatprep.subr.mxu0 0.0
        %733 = vmatpush1.msra.mxu0 %v398
        %734 = vmatprep.subr.mxu0 0.0
        %735 = vmatpush1.msra.mxu0 0.0
        %736 = vmatprep.subr.mxu0 0.0
        %737 = vmatpush1.msra.mxu0 0.0
        %738 = vmatprep.subr.mxu0 0.0
        %739 = vmatpush1.msra.mxu0 0.0
        %740 = vmatprep.subr.mxu0 0.0
        %741 = vmatpush1.msra.mxu0 0.0
        %742 = vmatprep.subr.mxu0 0.0
        %743 = vmatpush1.msra.mxu0 0.0
        %744 = vmatprep.subr.mxu0 0.0
        %745 = vmatpush1.msra.mxu0 0.0
        %746 = vmatprep.subr.mxu0 0.0
        %747 = vmatpush1.msra.mxu0 0.0
        %748 = vmatprep.subr.mxu0 0.0
        %749 = vmatpush1.msra.mxu0 0.0
        %750 = vmatprep.subr.mxu0 0.0
        %751 = vmatpush1.msra.mxu0 0.0
        %752 = vmatprep.subr.mxu0 0.0
        %753 = vmatpush1.msra.mxu0 0.0
        %754 = vmatprep.subr.mxu0 0.0
        %755 = vmatpush1.msra.mxu0 0.0
        %756 = vmatprep.subr.mxu0 0.0
        %757 = vmatpush1.msra.mxu0 0.0
        %758 = vmatprep.subr.mxu0 0.0
        %759 = vmatpush1.msra.mxu0 0.0
        %760 = vmatprep.subr.mxu0 0.0
        %761 = vmatpush1.msra.mxu0 0.0
        %762 = vmatprep.subr.mxu0 0.0
        %763 = vmatpush1.msra.mxu0 0.0
        %764 = vmatprep.subr.mxu0 0.0
        %765 = vmatpush1.msra.mxu0 0.0
        %766 = vmatprep.mubr.f32.mxu0 0.0
        %767 = vmatmul.mubr.f32.gmra.mrb[0].mxu0 %v701
        %v768 = vpop.f32.mrb[0].mxu0
        %v769 = vadd.f32 0.0, %v768
        %v770 = vpop.f32.mrb[0].mxu0
        %771 = vdwg.mxu0
        %v772 = vadd.f32 %v700, %v769
        %v773 = vtanh.pop %v772
        %774 = vst [vmem:[#allocation2] sm:$0xff] %v773
        %s775 = scalar_lea.vmem [#allocation5], 16
        %776 = vst [vmem:[%s775] sm:$0xff] %v773
        %s777 = scalar_lea.vmem [#allocation4], 24
        %v778 = vld [vmem:[%s777] sm:$0xff]
        %v779 = vld [vmem:[#allocation2] sm:$0xff]
        %780 = vmatprep.subr.mxu0 0.0
        %781 = vmatpush1.msra.mxu0 %v383
        %782 = vmatprep.subr.mxu0 0.0
        %783 = vmatpush1.msra.mxu0 %v384
        %784 = vmatprep.subr.mxu0 0.0
        %785 = vmatpush1.msra.mxu0 %v385
        %786 = vmatprep.subr.mxu0 0.0
        %787 = vmatpush1.msra.mxu0 %v386
        %788 = vmatprep.subr.mxu0 0.0
        %789 = vmatpush1.msra.mxu0 %v387
        %790 = vmatprep.subr.mxu0 0.0
        %791 = vmatpush1.msra.mxu0 %v388
        %792 = vmatprep.subr.mxu0 0.0
        %793 = vmatpush1.msra.mxu0 %v389
        %794 = vmatprep.subr.mxu0 0.0
        %795 = vmatpush1.msra.mxu0 %v390
        %796 = vmatprep.subr.mxu0 0.0
        %797 = vmatpush1.msra.mxu0 %v391
        %798 = vmatprep.subr.mxu0 0.0
        %799 = vmatpush1.msra.mxu0 %v392
        %800 = vmatprep.subr.mxu0 0.0
        %801 = vmatpush1.msra.mxu0 %v393
        %802 = vmatprep.subr.mxu0 0.0
        %803 = vmatpush1.msra.mxu0 %v394
        %804 = vmatprep.subr.mxu0 0.0
        %805 = vmatpush1.msra.mxu0 %v395
        %806 = vmatprep.subr.mxu0 0.0
        %807 = vmatpush1.msra.mxu0 %v396
        %808 = vmatprep.subr.mxu0 0.0
        %809 = vmatpush1.msra.mxu0 %v397
        %810 = vmatprep.subr.mxu0 0.0
        %811 = vmatpush1.msra.mxu0 %v398
        %812 = vmatprep.subr.mxu0 0.0
        %813 = vmatpush1.msra.mxu0 0.0
        %814 = vmatprep.subr.mxu0 0.0
        %815 = vmatpush1.msra.mxu0 0.0
        %816 = vmatprep.subr.mxu0 0.0
        %817 = vmatpush1.msra.mxu0 0.0
        %818 = vmatprep.subr.mxu0 0.0
        %819 = vmatpush1.msra.mxu0 0.0
        %820 = vmatprep.subr.mxu0 0.0
        %821 = vmatpush1.msra.mxu0 0.0
        %822 = vmatprep.subr.mxu0 0.0
        %823 = vmatpush1.msra.mxu0 0.0
        %824 = vmatprep.subr.mxu0 0.0
        %825 = vmatpush1.msra.mxu0 0.0
        %826 = vmatprep.subr.mxu0 0.0
        %827 = vmatpush1.msra.mxu0 0.0
        %828 = vmatprep.subr.mxu0 0.0
        %829 = vmatpush1.msra.mxu0 0.0
        %830 = vmatprep.subr.mxu0 0.0
        %831 = vmatpush1.msra.mxu0 0.0
        %832 = vmatprep.subr.mxu0 0.0
        %833 = vmatpush1.msra.mxu0 0.0
        %834 = vmatprep.subr.mxu0 0.0
        %835 = vmatpush1.msra.mxu0 0.0
        %836 = vmatprep.subr.mxu0 0.0
        %837 = vmatpush1.msra.mxu0 0.0
        %838 = vmatprep.subr.mxu0 0.0
        %839 = vmatpush1.msra.mxu0 0.0
        %840 = vmatprep.subr.mxu0 0.0
        %841 = vmatpush1.msra.mxu0 0.0
        %842 = vmatprep.subr.mxu0 0.0
        %843 = vmatpush1.msra.mxu0 0.0
        %844 = vmatprep.mubr.f32.mxu0 0.0
        %845 = vmatmul.mubr.f32.gmra.mrb[0].mxu0 %v779
        %v846 = vpop.f32.mrb[0].mxu0
        %v847 = vadd.f32 0.0, %v846
        %v848 = vpop.f32.mrb[0].mxu0
        %849 = vdwg.mxu0
        %v850 = vadd.f32 %v778, %v847
        %v851 = vtanh.pop %v850
        %852 = vst [vmem:[#allocation2] sm:$0xff] %v851
        %s853 = scalar_lea.vmem [#allocation5], 24
        %854 = vst [vmem:[%s853] sm:$0xff] %v851
        %v855 = vld [vmem:[#allocation5] sm:$0xff]
        %v856 = vld [vmem:[#allocation5 + $0x8] sm:$0xff]
        %v857 = vld [vmem:[#allocation5 + $0x10] sm:$0xff]
        %v858 = vld [vmem:[#allocation5 + $0x18] sm:$0xff]
        %v860 = vlaneseq
        %v861 = vshrl.u32 %v860, 7
        %v862 = vsub.s32 0, %v861
        %v863 = vrot.slane %v432, %v862
        %865 = vmatprep.subr.mxu0 0.0
        %866 = vmatpush1.msra.mxu0 %v399
        %867 = vmatprep.subr.mxu0 0.0
        %868 = vmatpush1.msra.mxu0 %v400
        %869 = vmatprep.subr.mxu0 0.0
        %870 = vmatpush1.msra.mxu0 %v401
        %871 = vmatprep.subr.mxu0 0.0
        %872 = vmatpush1.msra.mxu0 %v402
        %873 = vmatprep.subr.mxu0 0.0
        %874 = vmatpush1.msra.mxu0 %v403
        %875 = vmatprep.subr.mxu0 0.0
        %876 = vmatpush1.msra.mxu0 %v404
        %877 = vmatprep.subr.mxu0 0.0
        %878 = vmatpush1.msra.mxu0 %v405
        %879 = vmatprep.subr.mxu0 0.0
        %880 = vmatpush1.msra.mxu0 %v406
        %881 = vmatprep.subr.mxu0 0.0
        %882 = vmatpush1.msra.mxu0 %v407
        %883 = vmatprep.subr.mxu0 0.0
        %884 = vmatpush1.msra.mxu0 %v408
        %885 = vmatprep.subr.mxu0 0.0
        %886 = vmatpush1.msra.mxu0 %v409
        %887 = vmatprep.subr.mxu0 0.0
        %888 = vmatpush1.msra.mxu0 %v410
        %889 = vmatprep.subr.mxu0 0.0
        %890 = vmatpush1.msra.mxu0 %v411
        %891 = vmatprep.subr.mxu0 0.0
        %892 = vmatpush1.msra.mxu0 %v412
        %893 = vmatprep.subr.mxu0 0.0
        %894 = vmatpush1.msra.mxu0 %v413
        %895 = vmatprep.subr.mxu0 0.0
        %896 = vmatpush1.msra.mxu0 %v414
        %897 = vmatprep.subr.mxu0 0.0
        %898 = vmatpush1.msra.mxu0 0.0
        %899 = vmatprep.subr.mxu0 0.0
        %900 = vmatpush1.msra.mxu0 0.0
        %901 = vmatprep.subr.mxu0 0.0
        %902 = vmatpush1.msra.mxu0 0.0
        %903 = vmatprep.subr.mxu0 0.0
        %904 = vmatpush1.msra.mxu0 0.0
        %905 = vmatprep.subr.mxu0 0.0
        %906 = vmatpush1.msra.mxu0 0.0
        %907 = vmatprep.subr.mxu0 0.0
        %908 = vmatpush1.msra.mxu0 0.0
        %909 = vmatprep.subr.mxu0 0.0
        %910 = vmatpush1.msra.mxu0 0.0
        %911 = vmatprep.subr.mxu0 0.0
        %912 = vmatpush1.msra.mxu0 0.0
        %913 = vmatprep.subr.mxu0 0.0
        %914 = vmatpush1.msra.mxu0 0.0
        %915 = vmatprep.subr.mxu0 0.0
        %916 = vmatpush1.msra.mxu0 0.0
        %917 = vmatprep.subr.mxu0 0.0
        %918 = vmatpush1.msra.mxu0 0.0
        %919 = vmatprep.subr.mxu0 0.0
        %920 = vmatpush1.msra.mxu0 0.0
        %921 = vmatprep.subr.mxu0 0.0
        %922 = vmatpush1.msra.mxu0 0.0
        %923 = vmatprep.subr.mxu0 0.0
        %924 = vmatpush1.msra.mxu0 0.0
        %925 = vmatprep.subr.mxu0 0.0
        %926 = vmatpush1.msra.mxu0 0.0
        %927 = vmatprep.subr.mxu0 0.0
        %928 = vmatpush1.msra.mxu0 0.0
        %929 = vmatprep.mubr.f32.mxu0 0.0
        %930 = vmatmul.mubr.f32.gmra.mrb[0].mxu0 %v855
        %v931 = vpop.f32.mrb[0].mxu0
        %v932 = vadd.f32 %v863, %v931
        %v933 = vpop.f32.mrb[0].mxu0
        %934 = vmatprep.mubr.f32.mxu0 0.0
        %935 = vmatmul.mubr.f32.gmra.mrb[0].mxu0 %v856
        %v936 = vpop.f32.mrb[0].mxu0
        %v937 = vadd.f32 %v863, %v936
        %v938 = vpop.f32.mrb[0].mxu0
        %939 = vmatprep.mubr.f32.mxu0 0.0
        %940 = vmatmul.mubr.f32.gmra.mrb[0].mxu0 %v857
        %v941 = vpop.f32.mrb[0].mxu0
        %v942 = vadd.f32 %v863, %v941
        %v943 = vpop.f32.mrb[0].mxu0
        %944 = vmatprep.mubr.f32.mxu0 0.0
        %945 = vmatmul.mubr.f32.gmra.mrb[0].mxu0 %v858
        %v946 = vpop.f32.mrb[0].mxu0
        %v947 = vadd.f32 %v863, %v946
        %v948 = vpop.f32.mrb[0].mxu0
        %949 = vdwg.mxu0
        %950 = vst [vmem:[#allocation6] sm:$0xff] %v932
        %951 = vst [vmem:[#allocation6 + $0x8] sm:$0xff] %v937
        %952 = vst [vmem:[#allocation6 + $0x10] sm:$0xff] %v942
        %953 = vst [vmem:[#allocation6 + $0x18] sm:$0xff] %v947
        %s954 = smul.u32 0, 8
        %s955 = scalar_lea.vmem [#allocation6], %s954
        %v956 = vld [vmem:[%s955] sm:$0xff]
        %v957 = vld [vmem:[%s955 + $0x8] sm:$0xff]
        %v958 = vld [vmem:[#allocation3] sm:$0xff]
        %v959 = vld [vmem:[#allocation3 + $0x8] sm:$0xff]
        %960 = vmatprep.subr.mxu0 0.0
        %961 = vmatpush1.msra.mxu0 %v415
        %962 = vmatprep.subr.mxu0 0.0
        %963 = vmatpush1.msra.mxu0 %v416
        %964 = vmatprep.subr.mxu0 0.0
        %965 = vmatpush1.msra.mxu0 %v417
        %966 = vmatprep.subr.mxu0 0.0
        %967 = vmatpush1.msra.mxu0 %v418
        %968 = vmatprep.subr.mxu0 0.0
        %969 = vmatpush1.msra.mxu0 %v419
        %970 = vmatprep.subr.mxu0 0.0
        %971 = vmatpush1.msra.mxu0 %v420
        %972 = vmatprep.subr.mxu0 0.0
        %973 = vmatpush1.msra.mxu0 %v421
        %974 = vmatprep.subr.mxu0 0.0
        %975 = vmatpush1.msra.mxu0 %v422
        %976 = vmatprep.subr.mxu0 0.0
        %977 = vmatpush1.msra.mxu0 %v423
        %978 = vmatprep.subr.mxu0 0.0
        %979 = vmatpush1.msra.mxu0 %v424
        %980 = vmatprep.subr.mxu0 0.0
        %981 = vmatpush1.msra.mxu0 %v425
        %982 = vmatprep.subr.mxu0 0.0
        %983 = vmatpush1.msra.mxu0 %v426
        %984 = vmatprep.subr.mxu0 0.0
        %985 = vmatpush1.msra.mxu0 %v427
        %986 = vmatprep.subr.mxu0 0.0
        %987 = vmatpush1.msra.mxu0 %v428
        %988 = vmatprep.subr.mxu0 0.0
        %989 = vmatpush1.msra.mxu0 %v429
        %990 = vmatprep.subr.mxu0 0.0
        %991 = vmatpush1.msra.mxu0 %v430
        %992 = vmatprep.subr.mxu0 0.0
        %993 = vmatpush1.msra.mxu0 0.0
        %994 = vmatprep.subr.mxu0 0.0
        %995 = vmatpush1.msra.mxu0 0.0
        %996 = vmatprep.subr.mxu0 0.0
        %997 = vmatpush1.msra.mxu0 0.0
        %998 = vmatprep.subr.mxu0 0.0
        %999 = vmatpush1.msra.mxu0 0.0
        %1000 = vmatprep.subr.mxu0 0.0
        %1001 = vmatpush1.msra.mxu0 0.0
        %1002 = vmatprep.subr.mxu0 0.0
        %1003 = vmatpush1.msra.mxu0 0.0
        %1004 = vmatprep.subr.mxu0 0.0
        %1005 = vmatpush1.msra.mxu0 0.0
        %1006 = vmatprep.subr.mxu0 0.0
        %1007 = vmatpush1.msra.mxu0 0.0
        %1008 = vmatprep.subr.mxu0 0.0
        %1009 = vmatpush1.msra.mxu0 0.0
        %1010 = vmatprep.subr.mxu0 0.0
        %1011 = vmatpush1.msra.mxu0 0.0
        %1012 = vmatprep.subr.mxu0 0.0
        %1013 = vmatpush1.msra.mxu0 0.0
        %1014 = vmatprep.subr.mxu0 0.0
        %1015 = vmatpush1.msra.mxu0 0.0
        %1016 = vmatprep.subr.mxu0 0.0
        %1017 = vmatpush1.msra.mxu0 0.0
        %1018 = vmatprep.subr.mxu0 0.0
        %1019 = vmatpush1.msra.mxu0 0.0
        %1020 = vmatprep.subr.mxu0 0.0
        %1021 = vmatpush1.msra.mxu0 0.0
        %1022 = vmatprep.subr.mxu0 0.0
        %1023 = vmatpush1.msra.mxu0 0.0
        %1024 = vmatprep.mubr.f32.mxu0 0.0
        %1025 = vmatmul.mubr.f32.gmra.mrb[0].mxu0 %v958
        %v1026 = vpop.f32.mrb[0].mxu0
        %v1027 = vadd.f32 0.0, %v1026
        %v1028 = vpop.f32.mrb[0].mxu0
        %1029 = vmatprep.mubr.f32.mxu0 0.0
        %1030 = vmatmul.mubr.f32.gmra.mrb[0].mxu0 %v959
        %v1031 = vpop.f32.mrb[0].mxu0
        %v1032 = vadd.f32 0.0, %v1031
        %v1033 = vpop.f32.mrb[0].mxu0
        %1034 = vdwg.mxu0
        %v1035 = vadd.f32 %v956, %v1027
        %v1036 = vadd.f32 %v957, %v1032
        %v1037 = vtanh.pop %v1035
        %v1038 = vtanh.pop %v1036
        %1039 = vst [vmem:[#allocation3] sm:$0xff] %v1037
        %1040 = vst [vmem:[#allocation3 + $0x8] sm:$0xff] %v1038
        %s1041 = scalar_lea.vmem %s371, %s954 [#allocation16]
        %1042 = vst [vmem:[%s1041] sm:$0xff] %v1037
        %s1043 = sadd.s32 0, 1
        %s1044 = smul.u32 %s1043, 8
        %s1045 = scalar_lea.vmem %s371, %s1044 [#allocation16]
        %1046 = vst [vmem:[%s1045] sm:$0xff] %v1038
        %s1047 = smul.u32 2, 8
        %s1048 = scalar_lea.vmem [#allocation6], %s1047
        %v1049 = vld [vmem:[%s1048] sm:$0xff]
        %v1050 = vld [vmem:[%s1048 + $0x8] sm:$0xff]
        %v1051 = vld [vmem:[#allocation3] sm:$0xff]
        %v1052 = vld [vmem:[#allocation3 + $0x8] sm:$0xff]
        %1053 = vmatprep.subr.mxu0 0.0
        %1054 = vmatpush1.msra.mxu0 %v415
        %1055 = vmatprep.subr.mxu0 0.0
        %1056 = vmatpush1.msra.mxu0 %v416
        %1057 = vmatprep.subr.mxu0 0.0
        %1058 = vmatpush1.msra.mxu0 %v417
        %1059 = vmatprep.subr.mxu0 0.0
        %1060 = vmatpush1.msra.mxu0 %v418
        %1061 = vmatprep.subr.mxu0 0.0
        %1062 = vmatpush1.msra.mxu0 %v419
        %1063 = vmatprep.subr.mxu0 0.0
        %1064 = vmatpush1.msra.mxu0 %v420
        %1065 = vmatprep.subr.mxu0 0.0
        %1066 = vmatpush1.msra.mxu0 %v421
        %1067 = vmatprep.subr.mxu0 0.0
        %1068 = vmatpush1.msra.mxu0 %v422
        %1069 = vmatprep.subr.mxu0 0.0
        %1070 = vmatpush1.msra.mxu0 %v423
        %1071 = vmatprep.subr.mxu0 0.0
        %1072 = vmatpush1.msra.mxu0 %v424
        %1073 = vmatprep.subr.mxu0 0.0
        %1074 = vmatpush1.msra.mxu0 %v425
        %1075 = vmatprep.subr.mxu0 0.0
        %1076 = vmatpush1.msra.mxu0 %v426
        %1077 = vmatprep.subr.mxu0 0.0
        %1078 = vmatpush1.msra.mxu0 %v427
        %1079 = vmatprep.subr.mxu0 0.0
        %1080 = vmatpush1.msra.mxu0 %v428
        %1081 = vmatprep.subr.mxu0 0.0
        %1082 = vmatpush1.msra.mxu0 %v429
        %1083 = vmatprep.subr.mxu0 0.0
        %1084 = vmatpush1.msra.mxu0 %v430
        %1085 = vmatprep.subr.mxu0 0.0
        %1086 = vmatpush1.msra.mxu0 0.0
        %1087 = vmatprep.subr.mxu0 0.0
        %1088 = vmatpush1.msra.mxu0 0.0
        %1089 = vmatprep.subr.mxu0 0.0
        %1090 = vmatpush1.msra.mxu0 0.0
        %1091 = vmatprep.subr.mxu0 0.0
        %1092 = vmatpush1.msra.mxu0 0.0
        %1093 = vmatprep.subr.mxu0 0.0
        %1094 = vmatpush1.msra.mxu0 0.0
        %1095 = vmatprep.subr.mxu0 0.0
        %1096 = vmatpush1.msra.mxu0 0.0
        %1097 = vmatprep.subr.mxu0 0.0
        %1098 = vmatpush1.msra.mxu0 0.0
        %1099 = vmatprep.subr.mxu0 0.0
        %1100 = vmatpush1.msra.mxu0 0.0
        %1101 = vmatprep.subr.mxu0 0.0
        %1102 = vmatpush1.msra.mxu0 0.0
        %1103 = vmatprep.subr.mxu0 0.0
        %1104 = vmatpush1.msra.mxu0 0.0
        %1105 = vmatprep.subr.mxu0 0.0
        %1106 = vmatpush1.msra.mxu0 0.0
        %1107 = vmatprep.subr.mxu0 0.0
        %1108 = vmatpush1.msra.mxu0 0.0
        %1109 = vmatprep.subr.mxu0 0.0
        %1110 = vmatpush1.msra.mxu0 0.0
        %1111 = vmatprep.subr.mxu0 0.0
        %1112 = vmatpush1.msra.mxu0 0.0
        %1113 = vmatprep.subr.mxu0 0.0
        %1114 = vmatpush1.msra.mxu0 0.0
        %1115 = vmatprep.subr.mxu0 0.0
        %1116 = vmatpush1.msra.mxu0 0.0
        %1117 = vmatprep.mubr.f32.mxu0 0.0
        %1118 = vmatmul.mubr.f32.gmra.mrb[0].mxu0 %v1051
        %v1119 = vpop.f32.mrb[0].mxu0
        %v1120 = vadd.f32 0.0, %v1119
        %v1121 = vpop.f32.mrb[0].mxu0
        %1122 = vmatprep.mubr.f32.mxu0 0.0
        %1123 = vmatmul.mubr.f32.gmra.mrb[0].mxu0 %v1052
        %v1124 = vpop.f32.mrb[0].mxu0
        %v1125 = vadd.f32 0.0, %v1124
        %v1126 = vpop.f32.mrb[0].mxu0
        %1127 = vdwg.mxu0
        %v1128 = vadd.f32 %v1049, %v1120
        %v1129 = vadd.f32 %v1050, %v1125
        %v1130 = vtanh.pop %v1128
        %v1131 = vtanh.pop %v1129
        %1132 = vst [vmem:[#allocation3] sm:$0xff] %v1130
        %1133 = vst [vmem:[#allocation3 + $0x8] sm:$0xff] %v1131
        %s1134 = scalar_lea.vmem %s371, %s1047 [#allocation16]
        %1135 = vst [vmem:[%s1134] sm:$0xff] %v1130
        %s1136 = sadd.s32 2, 1
        %s1137 = smul.u32 %s1136, 8
        %s1138 = scalar_lea.vmem %s371, %s1137 [#allocation16]
        %1139 = vst [vmem:[%s1138] sm:$0xff] %v1131
        %s1140 = sand.u32 %s202, 1
        %s1141 = scalar_lea.sflag [#allocation9], %s1140
        %s1142 = sand.u32 %s202, 1
        %s1143 = smul.addr %s1142, 32
        %s1144 = scalar_lea.vmem [#allocation16], %s1143
        // Predicated region
        $region73: #{tpu_custom_call.1} parent=47 // pred_check
          %p1145 = pneg %p212
        $region74: #{tpu_custom_call.1} parent=47 // pred_check_branch
          %1147 = sbr.rel (%p1145) target = $region76
        $region75: #{tpu_custom_call.1} parent=47 // pred_region
          %s1148 = smul.u32 4, %s31
          %s1150 = ssub.s32 512, 512
          %1151 = vsyncadd %s1141, %s1150
          %s1152 = sadd.s32 %s30, %s1148
          %s1153 = smul.addr %s1152, 128
          %s1154 = scalar_lea.hbm %s7, %s1153
          %s1155 = sshll.u32 %s1144, 4
          %s1156 = int_to_ptr.vmem [resolvable:$true] %s1155
          %1161 = dma.vmem_to_hbm [thread:$0]  %s1156, 512, %s1154, %s1141, 128, 128, 8
        $region76: #{tpu_custom_call.1} parent=47 // pred_fallthru
          _
      $region48: #{tpu_custom_call.1} parent=5 // pred_fallthru
        _
      %p1162 = scmp.le.s32.totalorder 2, %s21
      // Predicated region
      $region77: #{tpu_custom_call.1} parent=5 // pred_check
        %p1163 = pneg %p1162
      $region78: #{tpu_custom_call.1} parent=5 // pred_check_branch
        %1165 = sbr.rel (%p1163) target = $region80
      $region79: #{tpu_custom_call.1} parent=5 // pred_region
        %s1166 = ssub.s32 %s21, 2
        // Predicated region
        $region81: #{tpu_custom_call.1} parent=79 // pred_check
          %p1167 = pneg %p218
        $region82: #{tpu_custom_call.1} parent=79 // pred_check_branch
          %1169 = sbr.rel (%p1167) target = $region84
        $region83: #{tpu_custom_call.1} parent=79 // pred_region
          %s1170 = sand.u32 %s203, 1
          %s1171 = scalar_lea.sflag [#allocation9], %s1170
          %s1172 = sand.u32 %s203, 1
          %s1173 = smul.addr %s1172, 32
          %s1174 = scalar_lea.vmem [#allocation16], %s1173
          %1175 = dma.done %s1171, 512
        $region84: #{tpu_custom_call.1} parent=79 // pred_fallthru
          _
      $region80: #{tpu_custom_call.1} parent=5 // pred_fallthru
        _
    $region6: #{tpu_custom_call.1} parent=1 // loop_footer
      %s25 = sadd.s32 1, %s21
    $region7: #{tpu_custom_call.1} parent=1 // loop_footer_branch
      %20 = sbr.rel target = $region3
    $region8: #{tpu_custom_call.1} parent=1 // loop_exit
      _
    %1176 = vsyncpa [#allocation8], 1
    %s1177 = scalar_lea.sflag [#allocation8], 1
    %1178 = vsyncpa %s1177, 1
    %1179 = vsyncpa [#allocation11], 1
    %1180 = vsyncpa [#allocation14], 1
    %1181 = vsyncpa [#allocation9], 1
    %s1182 = scalar_lea.sflag [#allocation9], 1
    %1183 = vsyncpa %s1182, 1

</llo_original>
